<compile_context>
chip_gen: v7x
topology: tpu7x:2x2x1
jax: 0.10.0
libtpu: 0.0.40
codegen_flags: <defaults>
</compile_context>

<pallas_src>
import math

import jax
import jax.numpy as jnp
from jax.experimental import pallas as pl
from jax.experimental.pallas import tpu as pltpu  # noqa: F401  (imported for completeness)

# ----------------------------- config -------------------------------------
B = 2           # batch
S = 8           # sequence length
H = 32          # hidden_size
NH = 4          # num_attention_heads
HD = H // NH    # attention_head_size
I = 64          # intermediate_size
EPS = 1e-12     # layer_norm_eps

BS = B * S      # 16  rows of the "real" activations
G = NH * B      # 8   (head, batch) blocks
R = G * S       # 64  stacked rows: r = h*B*S + b*S + s
NEG = -1e30     # large negative -> exp underflows to exactly 0 (same probs as -inf)


# ----------------------------- kernel helpers -----------------------------
def _erf(x):
    # erf via Abramowitz-Stegun 7.1.26 (|err| < 1.5e-7); only mul/add/exp/reciprocal
    # so it lowers cleanly (VPU + EUP).
    a = jnp.abs(x)
    t = pl.reciprocal(1.0 + 0.3275911 * a, approx=True)          # EUP, ~free
    poly = t * (0.254829592 + t * (-0.284496736 + t * (1.421413741
               + t * (-1.453152027 + t * 1.061405429))))
    y = 1.0 - poly * jnp.exp(-a * a)
    return jnp.where(x >= 0, y, -y)


def _gelu_exact(x):
    # matches torch.nn.functional.gelu (exact / erf form)
    return 0.5 * x * (1.0 + _erf(x * (1.0 / math.sqrt(2.0))))


def _layernorm(x, gamma, beta):
    mu = jnp.mean(x, axis=-1, keepdims=True)
    var = jnp.mean((x - mu) ** 2, axis=-1, keepdims=True)
    return (x - mu) * jax.lax.rsqrt(var + EPS) * gamma + beta


# ----------------------------- the fused kernel ----------------------------
def layoutlmv2_layer_kernel(
    x_ref, spe_ref, add_ref, hm_ref, fold_ref,
    qkvw_ref, qb_ref, vb_ref,
    aow_ref, aob_ref, ln1g_ref, ln1b_ref,
    iw_ref, ib_ref, ow_ref, ob_ref, ln2g_ref, ln2b_ref,
    out_ref, probs_ref,
):
    x = x_ref[...]                                     # (BS, H) float32

    # --- replicate rows so the head index lives in the sublane (row) direction ---
    x_t = jnp.concatenate([x] * NH, axis=0)            # (R, H); row r = h*BS + bs

    # --- fast_qkv projection (one matmul; q/v get explicit biases) ---
    qkv = jnp.dot(x_t, qkvw_ref[...], preferred_element_type=jnp.float32)   # (R, 3H)
    hm = hm_ref[...]                                   # (R, H): 1 on head-h lanes in row-block h
    scale = 1.0 / math.sqrt(HD)
    q_t = (qkv[:, :H] + qb_ref[...]) * scale           # (R, H)
    k_t = qkv[:, H:2 * H] * hm                         # (R, H) head-selected keys
    v_t = (qkv[:, 2 * H:] + vb_ref[...]) * hm          # (R, H) head-selected values

    # --- all (batch, head) attention blocks in a single MXU op ---
    # add_ref: rel_pos + rel_2d_pos (+ key mask) on the (head,batch) block diagonal,
    #          -1e30 everywhere else -> off-diagonal blocks vanish in the softmax.
    sc = jax.lax.dot_general(q_t, k_t, (((1,), (1,)), ((), ())),
                             preferred_element_type=jnp.float32)            # (R, R)
    sc = sc + add_ref[...]

    sc = sc - jnp.max(sc, axis=-1, keepdims=True)
    e = jnp.exp(sc)
    p = e * pl.reciprocal(jnp.sum(e, axis=-1, keepdims=True), approx=True)  # (R, R)
    # NOTE: attention/hidden dropout prob = 0 (inference) -> dropout is identity.

    # --- attention probs: fold the R columns down to S (off-diagonal entries are exactly 0),
    #     single store in a (R, S) layout; wrapper reshapes to (B, NH, S, S). ---
    probs_ref[...] = jnp.dot(p, fold_ref[...], preferred_element_type=jnp.float32)  # (R, S)

    # --- context: one P@V MXU op, then sum the NH row blocks (lanes already in place) ---
    ctx_w = jnp.dot(p, v_t, preferred_element_type=jnp.float32)             # (R, H)
    ctx = ctx_w[0:BS]
    for h in range(1, NH):
        ctx = ctx + ctx_w[h * BS:(h + 1) * BS]                              # (BS, H)

    # --- SelfOutput: dense + residual + LayerNorm ---
    attn = jnp.dot(ctx, aow_ref[...], preferred_element_type=jnp.float32) + aob_ref[...]
    h1 = _layernorm(attn + x, ln1g_ref[...], ln1b_ref[...])                 # (BS, H)

    # --- Intermediate: dense + exact gelu ---
    inter = jnp.dot(h1, iw_ref[...], preferred_element_type=jnp.float32) + ib_ref[...]
    inter = _gelu_exact(inter)                                              # (BS, I)

    # --- Output: dense (+ spatial_position_embeddings) + residual + LayerNorm ---
    ff = jnp.dot(inter, ow_ref[...], preferred_element_type=jnp.float32) + ob_ref[...]
    ff = ff + spe_ref[...]
    out_ref[...] = _layernorm(ff + h1, ln2g_ref[...], ln2b_ref[...])        # (BS, H)


# ----------------------------- wrapper --------------------------------------
def layoutlmv2_layer(hidden_states, attention_mask, rel_pos, rel_2d_pos,
                     spatial_position_embeddings, params):
    (qkvw, qb, vb, aow, aob, ln1g, ln1b, iw, ib, ow, ob, ln2g, ln2b) = params

    x2d = hidden_states.reshape(BS, H).astype(jnp.float32)
    spe2d = spatial_position_embeddings.reshape(BS, H).astype(jnp.float32)

    # precompute the block-diagonal additive term: bias on diagonal blocks, NEG elsewhere,
    # NEG also on masked key columns (mask > 0.5 means "masked", as in the module).
    neg = jnp.float32(NEG)
    bias = (rel_pos + rel_2d_pos).astype(jnp.float32)                    # (B, NH, S, S)
    key_masked = attention_mask[:, 0, :] > 0.5                           # (B, S)
    bias = jnp.where(key_masked[:, None, None, :], neg, bias)
    bias_hb = jnp.transpose(bias, (1, 0, 2, 3)).reshape(G, S, S)         # block g = h*B + b
    eye = jnp.eye(G, dtype=bool)
    additive = jnp.where(eye[:, None, :, None], bias_hb[:, :, None, :], neg)
    additive = additive.reshape(R, R)                                    # (64, 64)

    # head lane selector: row-block h keeps only lanes [h*HD, (h+1)*HD)
    head_mask = (jnp.arange(R)[:, None] // BS
                 == jnp.arange(H)[None, :] // HD).astype(jnp.float32)    # (R, H)
    # fold matrix: collapses the R prob columns to S (valid block is the only nonzero one)
    foldmat = (jnp.arange(R)[:, None] % S
               == jnp.arange(S)[None, :]).astype(jnp.float32)            # (R, S)

    out2d, probs2d = pl.pallas_call(
        layoutlmv2_layer_kernel,
        out_shape=(jax.ShapeDtypeStruct((BS, H), jnp.float32),
                   jax.ShapeDtypeStruct((R, S), jnp.float32)),
    )(x2d, spe2d, additive, head_mask, foldmat,
      qkvw, qb, vb, aow, aob, ln1g, ln1b, iw, ib, ow, ob, ln2g, ln2b)

    layer_output = out2d.reshape(B, S, H)
    attention_probs = probs2d.reshape(NH, B, S, S).transpose(1, 0, 2, 3)  # (B, NH, S, S)
    return layer_output, attention_probs


# ----------------------------- plain-JAX reference ---------------------------
def reference(hs, mask, rel_pos, rel_2d_pos, spe, params):
    qkvw, qb, vb, aow, aob, ln1g, ln1b, iw, ib, ow, ob, ln2g, ln2b = params
    qkv = hs @ qkvw
    q, k, v = jnp.split(qkv, 3, axis=-1)
    q = q + qb
    v = v + vb

    def heads(x):
        return x.reshape(B, S, NH, HD).transpose(0, 2, 1, 3)

    qh = heads(q) / math.sqrt(HD)
    kh = heads(k)
    vh = heads(v)
    sc = qh @ kh.transpose(0, 1, 3, 2) + rel_pos + rel_2d_pos
    sc = jnp.where(mask[:, :, None, :] > 0.5, -jnp.inf, sc)
    p = jax.nn.softmax(sc.astype(jnp.float32), axis=-1)
    ctx = (p @ vh).transpose(0, 2, 1, 3).reshape(B, S, H)

    def ln(x, g, b_):
        mu = x.mean(-1, keepdims=True)
        var = ((x - mu) ** 2).mean(-1, keepdims=True)
        return (x - mu) * jax.lax.rsqrt(var + EPS) * g + b_

    attn_out = ctx @ aow + aob
    h1 = ln(attn_out + hs, ln1g, ln1b)
    inter = jax.nn.gelu(h1 @ iw + ib, approximate=False)
    ff = inter @ ow + ob + spe
    return ln(ff + h1, ln2g, ln2b), p


# ----------------------------- main ------------------------------------------
if __name__ == "__main__":
    key = jax.random.PRNGKey(0)
    ks = jax.random.split(key, 16)

    def nrm(k, shape, scale=0.02):
        return (scale * jax.random.normal(k, shape)).astype(jnp.float32)

    # parameters (deterministic synthetic init)
    qkvw = nrm(ks[0], (H, 3 * H))
    qb = jnp.zeros((1, H), jnp.float32)          # q_bias param (init zeros, as in the module)
    vb = jnp.zeros((1, H), jnp.float32)          # v_bias param
    aow = nrm(ks[1], (H, H)); aob = nrm(ks[2], (1, H))
    ln1g = jnp.ones((1, H), jnp.float32); ln1b = jnp.zeros((1, H), jnp.float32)
    iw = nrm(ks[3], (H, I)); ib = nrm(ks[4], (1, I))
    ow = nrm(ks[5], (I, H)); ob = nrm(ks[6], (1, H))
    ln2g = jnp.ones((1, H), jnp.float32); ln2b = jnp.zeros((1, H), jnp.float32)
    params = (qkvw, qb, vb, aow, aob, ln1g, ln1b, iw, ib, ow, ob, ln2g, ln2b)

    # inputs
    hs = nrm(ks[7], (B, S, H), scale=1.0)
    rel_pos = nrm(ks[8], (B, NH, S, S), scale=0.1)
    rel_2d_pos = nrm(ks[9], (B, NH, S, S), scale=0.1)
    spe = nrm(ks[10], (B, S, H), scale=0.1)
    attention_mask = jnp.zeros((B, 1, S), jnp.float32)
    attention_mask = attention_mask.at[1, 0, S - 1].set(1.0)   # mask last key of batch 1
    # NOTE: a fully-masked query row would give NaN probs in PyTorch and inf/NaN here
    # (reciprocal of 0); such rows do not occur in this test.

    layer_fn = jax.jit(layoutlmv2_layer)
    layer_out, attn_probs = layer_fn(hs, attention_mask, rel_pos, rel_2d_pos, spe, params)
    jax.block_until_ready((layer_out, attn_probs))

    ref_out, ref_probs = reference(hs, attention_mask, rel_pos, rel_2d_pos, spe, params)
    assert jnp.allclose(layer_out, ref_out, rtol=2e-3, atol=2e-3), "layer output mismatch"
    assert jnp.allclose(attn_probs, ref_probs, rtol=2e-3, atol=2e-3), "attention probs mismatch"

    print("KERNEL_OK")
</pallas_src>

<mosaic_0001>
module attributes {stable_mosaic.version = 11 : i64} {
  func.func @layoutlmv2_layer_kernel(%arg0: memref<16x32xf32, #tpu.memory_space<vmem>>, %arg1: memref<16x32xf32, #tpu.memory_space<vmem>>, %arg2: memref<64x64xf32, #tpu.memory_space<vmem>>, %arg3: memref<64x32xf32, #tpu.memory_space<vmem>>, %arg4: memref<64x8xf32, #tpu.memory_space<vmem>>, %arg5: memref<32x96xf32, #tpu.memory_space<vmem>>, %arg6: memref<1x32xf32, #tpu.memory_space<vmem>>, %arg7: memref<1x32xf32, #tpu.memory_space<vmem>>, %arg8: memref<32x32xf32, #tpu.memory_space<vmem>>, %arg9: memref<1x32xf32, #tpu.memory_space<vmem>>, %arg10: memref<1x32xf32, #tpu.memory_space<vmem>>, %arg11: memref<1x32xf32, #tpu.memory_space<vmem>>, %arg12: memref<32x64xf32, #tpu.memory_space<vmem>>, %arg13: memref<1x64xf32, #tpu.memory_space<vmem>>, %arg14: memref<64x32xf32, #tpu.memory_space<vmem>>, %arg15: memref<1x32xf32, #tpu.memory_space<vmem>>, %arg16: memref<1x32xf32, #tpu.memory_space<vmem>>, %arg17: memref<1x32xf32, #tpu.memory_space<vmem>>, %arg18: memref<16x32xf32, #tpu.memory_space<vmem>>, %arg19: memref<64x8xf32, #tpu.memory_space<vmem>>) attributes {dimension_semantics = [], scalar_prefetch = 0 : i64, scratch_operands = 0 : i64, tpu.core_type = #tpu.core_type<tc>} {
    %c0 = arith.constant 0 : index
    %c0_0 = arith.constant 0 : index
    %0 = vector.load %arg0[%c0, %c0_0] : memref<16x32xf32, #tpu.memory_space<vmem>>, vector<16x32xf32>
    %1 = tpu.concatenate %0, %0, %0, %0 in 0 : vector<16x32xf32>, vector<16x32xf32>, vector<16x32xf32>, vector<16x32xf32> -> vector<64x32xf32>
    %c0_1 = arith.constant 0 : index
    %c0_2 = arith.constant 0 : index
    %2 = vector.load %arg5[%c0_1, %c0_2] : memref<32x96xf32, #tpu.memory_space<vmem>>, vector<32x96xf32>
    %cst = arith.constant dense<0.000000e+00> : vector<64x96xf32>
    %3 = tpu.matmul %1, %2, %cst {dimension_numbers = #tpu.dot_dimension_numbers<[1], [0], [0], [1], [0, 0, 1, 1], [], []>} : vector<64x32xf32>, vector<32x96xf32>, vector<64x96xf32> -> vector<64x96xf32>
    %c0_3 = arith.constant 0 : index
    %c0_4 = arith.constant 0 : index
    %4 = vector.load %arg3[%c0_3, %c0_4] : memref<64x32xf32, #tpu.memory_space<vmem>>, vector<64x32xf32>
    %5 = vector.extract_strided_slice %3 {offsets = [0, 0], sizes = [64, 32], strides = [1, 1]} : vector<64x96xf32> to vector<64x32xf32>
    %c0_5 = arith.constant 0 : index
    %c0_6 = arith.constant 0 : index
    %6 = vector.load %arg6[%c0_5, %c0_6] : memref<1x32xf32, #tpu.memory_space<vmem>>, vector<1x32xf32>
    %7 = vector.broadcast %6 : vector<1x32xf32> to vector<64x32xf32>
    %8 = arith.addf %5, %7 : vector<64x32xf32>
    %cst_7 = arith.constant 0.353553385 : f32
    %9 = vector.broadcast %cst_7 : f32 to vector<64x32xf32>
    %10 = arith.mulf %8, %9 : vector<64x32xf32>
    %11 = vector.extract_strided_slice %3 {offsets = [0, 32], sizes = [64, 32], strides = [1, 1]} : vector<64x96xf32> to vector<64x32xf32>
    %12 = arith.mulf %11, %4 : vector<64x32xf32>
    %13 = vector.extract_strided_slice %3 {offsets = [0, 64], sizes = [64, 32], strides = [1, 1]} : vector<64x96xf32> to vector<64x32xf32>
    %c0_8 = arith.constant 0 : index
    %c0_9 = arith.constant 0 : index
    %14 = vector.load %arg7[%c0_8, %c0_9] : memref<1x32xf32, #tpu.memory_space<vmem>>, vector<1x32xf32>
    %15 = vector.broadcast %14 : vector<1x32xf32> to vector<64x32xf32>
    %16 = arith.addf %13, %15 : vector<64x32xf32>
    %17 = arith.mulf %16, %4 : vector<64x32xf32>
    %cst_10 = arith.constant dense<0.000000e+00> : vector<64x64xf32>
    %18 = tpu.matmul %10, %12, %cst_10 {dimension_numbers = #tpu.dot_dimension_numbers<[1], [1], [0], [0], [0, 0, 1, 0], [], []>} : vector<64x32xf32>, vector<64x32xf32>, vector<64x64xf32> -> vector<64x64xf32>
    %c0_11 = arith.constant 0 : index
    %c0_12 = arith.constant 0 : index
    %19 = vector.load %arg2[%c0_11, %c0_12] : memref<64x64xf32, #tpu.memory_space<vmem>>, vector<64x64xf32>
    %20 = arith.addf %18, %19 : vector<64x64xf32>
    %cst_13 = arith.constant dense<0xFF800000> : vector<64xf32>
    %21 = vector.multi_reduction <maximumf>, %20, %cst_13 [1] : vector<64x64xf32> to vector<64xf32>
    %22 = vector.shape_cast %21 : vector<64xf32> to vector<64x1xf32>
    %23 = vector.broadcast %22 : vector<64x1xf32> to vector<64x64xf32>
    %24 = arith.subf %20, %23 : vector<64x64xf32>
    %25 = math.exp %24 : vector<64x64xf32>
    %cst_14 = arith.constant dense<0.000000e+00> : vector<64xf32>
    %26 = vector.multi_reduction <add>, %25, %cst_14 [1] : vector<64x64xf32> to vector<64xf32>
    %27 = vector.shape_cast %26 : vector<64xf32> to vector<64x1xf32>
    %28 = tpu.reciprocal %27 {approx = true} : vector<64x1xf32> -> vector<64x1xf32>
    %29 = vector.broadcast %28 : vector<64x1xf32> to vector<64x64xf32>
    %30 = arith.mulf %25, %29 : vector<64x64xf32>
    %c0_15 = arith.constant 0 : index
    %c0_16 = arith.constant 0 : index
    %31 = vector.load %arg4[%c0_15, %c0_16] : memref<64x8xf32, #tpu.memory_space<vmem>>, vector<64x8xf32>
    %cst_17 = arith.constant dense<0.000000e+00> : vector<64x8xf32>
    %32 = tpu.matmul %30, %31, %cst_17 {dimension_numbers = #tpu.dot_dimension_numbers<[1], [0], [0], [1], [0, 0, 1, 1], [], []>} : vector<64x64xf32>, vector<64x8xf32>, vector<64x8xf32> -> vector<64x8xf32>
    %c0_18 = arith.constant 0 : index
    %c0_19 = arith.constant 0 : index
    %33 = vector.load %arg19[%c0_18, %c0_19] : memref<64x8xf32, #tpu.memory_space<vmem>>, vector<64x8xf32>
    tpu.vector_store %arg19[%c0_18, %c0_19], %32 {strides = array<i32>} : memref<64x8xf32, #tpu.memory_space<vmem>>, vector<64x8xf32>,
    %cst_20 = arith.constant dense<0.000000e+00> : vector<64x32xf32>
    %34 = tpu.matmul %30, %17, %cst_20 {dimension_numbers = #tpu.dot_dimension_numbers<[1], [0], [0], [1], [0, 0, 1, 1], [], []>} : vector<64x64xf32>, vector<64x32xf32>, vector<64x32xf32> -> vector<64x32xf32>
    %35 = vector.extract_strided_slice %34 {offsets = [0, 0], sizes = [16, 32], strides = [1, 1]} : vector<64x32xf32> to vector<16x32xf32>
    %36 = vector.extract_strided_slice %34 {offsets = [16, 0], sizes = [16, 32], strides = [1, 1]} : vector<64x32xf32> to vector<16x32xf32>
    %37 = arith.addf %35, %36 : vector<16x32xf32>
    %38 = vector.extract_strided_slice %34 {offsets = [32, 0], sizes = [16, 32], strides = [1, 1]} : vector<64x32xf32> to vector<16x32xf32>
    %39 = arith.addf %37, %38 : vector<16x32xf32>
    %40 = vector.extract_strided_slice %34 {offsets = [48, 0], sizes = [16, 32], strides = [1, 1]} : vector<64x32xf32> to vector<16x32xf32>
    %41 = arith.addf %39, %40 : vector<16x32xf32>
    %c0_21 = arith.constant 0 : index
    %c0_22 = arith.constant 0 : index
    %42 = vector.load %arg8[%c0_21, %c0_22] : memref<32x32xf32, #tpu.memory_space<vmem>>, vector<32x32xf32>
    %cst_23 = arith.constant dense<0.000000e+00> : vector<16x32xf32>
    %43 = tpu.matmul %41, %42, %cst_23 {dimension_numbers = #tpu.dot_dimension_numbers<[1], [0], [0], [1], [0, 0, 1, 1], [], []>} : vector<16x32xf32>, vector<32x32xf32>, vector<16x32xf32> -> vector<16x32xf32>
    %c0_24 = arith.constant 0 : index
    %c0_25 = arith.constant 0 : index
    %44 = vector.load %arg9[%c0_24, %c0_25] : memref<1x32xf32, #tpu.memory_space<vmem>>, vector<1x32xf32>
    %45 = vector.broadcast %44 : vector<1x32xf32> to vector<16x32xf32>
    %46 = arith.addf %43, %45 : vector<16x32xf32>
    %47 = arith.addf %46, %0 : vector<16x32xf32>
    %c0_26 = arith.constant 0 : index
    %c0_27 = arith.constant 0 : index
    %48 = vector.load %arg10[%c0_26, %c0_27] : memref<1x32xf32, #tpu.memory_space<vmem>>, vector<1x32xf32>
    %c0_28 = arith.constant 0 : index
    %c0_29 = arith.constant 0 : index
    %49 = vector.load %arg11[%c0_28, %c0_29] : memref<1x32xf32, #tpu.memory_space<vmem>>, vector<1x32xf32>
    %cst_30 = arith.constant dense<0.000000e+00> : vector<16xf32>
    %50 = vector.multi_reduction <add>, %47, %cst_30 [1] : vector<16x32xf32> to vector<16xf32>
    %51 = vector.shape_cast %50 : vector<16xf32> to vector<16x1xf32>
    %cst_31 = arith.constant 3.200000e+01 : f32
    %52 = vector.broadcast %cst_31 : f32 to vector<16x1xf32>
    %53 = arith.divf %51, %52 : vector<16x1xf32>
    %54 = vector.broadcast %53 : vector<16x1xf32> to vector<16x32xf32>
    %55 = arith.subf %47, %54 : vector<16x32xf32>
    %56 = arith.mulf %55, %55 : vector<16x32xf32>
    %cst_32 = arith.constant dense<0.000000e+00> : vector<16xf32>
    %57 = vector.multi_reduction <add>, %56, %cst_32 [1] : vector<16x32xf32> to vector<16xf32>
    %58 = vector.shape_cast %57 : vector<16xf32> to vector<16x1xf32>
    %cst_33 = arith.constant 3.200000e+01 : f32
    %59 = vector.broadcast %cst_33 : f32 to vector<16x1xf32>
    %60 = arith.divf %58, %59 : vector<16x1xf32>
    %61 = vector.broadcast %53 : vector<16x1xf32> to vector<16x32xf32>
    %62 = arith.subf %47, %61 : vector<16x32xf32>
    %cst_34 = arith.constant 9.99999996E-13 : f32
    %63 = vector.broadcast %cst_34 : f32 to vector<16x1xf32>
    %64 = arith.addf %60, %63 : vector<16x1xf32>
    %65 = math.rsqrt %64 : vector<16x1xf32>
    %66 = vector.broadcast %65 : vector<16x1xf32> to vector<16x32xf32>
    %67 = arith.mulf %62, %66 : vector<16x32xf32>
    %68 = vector.broadcast %48 : vector<1x32xf32> to vector<16x32xf32>
    %69 = arith.mulf %67, %68 : vector<16x32xf32>
    %70 = vector.broadcast %49 : vector<1x32xf32> to vector<16x32xf32>
    %71 = arith.addf %69, %70 : vector<16x32xf32>
    %c0_35 = arith.constant 0 : index
    %c0_36 = arith.constant 0 : index
    %72 = vector.load %arg12[%c0_35, %c0_36] : memref<32x64xf32, #tpu.memory_space<vmem>>, vector<32x64xf32>
    %cst_37 = arith.constant dense<0.000000e+00> : vector<16x64xf32>
    %73 = tpu.matmul %71, %72, %cst_37 {dimension_numbers = #tpu.dot_dimension_numbers<[1], [0], [0], [1], [0, 0, 1, 1], [], []>} : vector<16x32xf32>, vector<32x64xf32>, vector<16x64xf32> -> vector<16x64xf32>
    %c0_38 = arith.constant 0 : index
    %c0_39 = arith.constant 0 : index
    %74 = vector.load %arg13[%c0_38, %c0_39] : memref<1x64xf32, #tpu.memory_space<vmem>>, vector<1x64xf32>
    %75 = vector.broadcast %74 : vector<1x64xf32> to vector<16x64xf32>
    %76 = arith.addf %73, %75 : vector<16x64xf32>
    %cst_40 = arith.constant 5.000000e-01 : f32
    %77 = vector.broadcast %cst_40 : f32 to vector<16x64xf32>
    %78 = arith.mulf %77, %76 : vector<16x64xf32>
    %cst_41 = arith.constant 0.707106769 : f32
    %79 = vector.broadcast %cst_41 : f32 to vector<16x64xf32>
    %80 = arith.mulf %76, %79 : vector<16x64xf32>
    %81 = math.absf %80 : vector<16x64xf32>
    %cst_42 = arith.constant 0.327591091 : f32
    %82 = vector.broadcast %cst_42 : f32 to vector<16x64xf32>
    %83 = arith.mulf %82, %81 : vector<16x64xf32>
    %cst_43 = arith.constant 1.000000e+00 : f32
    %84 = vector.broadcast %cst_43 : f32 to vector<16x64xf32>
    %85 = arith.addf %84, %83 : vector<16x64xf32>
    %86 = tpu.reciprocal %85 {approx = true} : vector<16x64xf32> -> vector<16x64xf32>
    %cst_44 = arith.constant 1.06140542 : f32
    %87 = vector.broadcast %cst_44 : f32 to vector<16x64xf32>
    %88 = arith.mulf %86, %87 : vector<16x64xf32>
    %cst_45 = arith.constant -1.45315206 : f32
    %89 = vector.broadcast %cst_45 : f32 to vector<16x64xf32>
    %90 = arith.addf %89, %88 : vector<16x64xf32>
    %91 = arith.mulf %86, %90 : vector<16x64xf32>
    %cst_46 = arith.constant 1.42141378 : f32
    %92 = vector.broadcast %cst_46 : f32 to vector<16x64xf32>
    %93 = arith.addf %92, %91 : vector<16x64xf32>
    %94 = arith.mulf %86, %93 : vector<16x64xf32>
    %cst_47 = arith.constant -0.284496725 : f32
    %95 = vector.broadcast %cst_47 : f32 to vector<16x64xf32>
    %96 = arith.addf %95, %94 : vector<16x64xf32>
    %97 = arith.mulf %86, %96 : vector<16x64xf32>
    %cst_48 = arith.constant 0.254829586 : f32
    %98 = vector.broadcast %cst_48 : f32 to vector<16x64xf32>
    %99 = arith.addf %98, %97 : vector<16x64xf32>
    %100 = arith.mulf %86, %99 : vector<16x64xf32>
    %cst_49 = arith.constant 0.000000e+00 : f32
    %101 = vector.broadcast %cst_49 : f32 to vector<16x64xf32>
    %102 = arith.subf %101, %81 : vector<16x64xf32>
    %103 = arith.mulf %102, %81 : vector<16x64xf32>
    %104 = math.exp %103 : vector<16x64xf32>
    %105 = arith.mulf %100, %104 : vector<16x64xf32>
    %cst_50 = arith.constant 1.000000e+00 : f32
    %106 = vector.broadcast %cst_50 : f32 to vector<16x64xf32>
    %107 = arith.subf %106, %105 : vector<16x64xf32>
    %cst_51 = arith.constant 0.000000e+00 : f32
    %108 = vector.broadcast %cst_51 : f32 to vector<16x64xf32>
    %109 = arith.cmpf oge, %80, %108 : vector<16x64xf32>
    %cst_52 = arith.constant 0.000000e+00 : f32
    %110 = vector.broadcast %cst_52 : f32 to vector<16x64xf32>
    %111 = arith.subf %110, %107 : vector<16x64xf32>
    %112 = arith.select %109, %107, %111 : vector<16x64xi1>, vector<16x64xf32>
    %cst_53 = arith.constant 1.000000e+00 : f32
    %113 = vector.broadcast %cst_53 : f32 to vector<16x64xf32>
    %114 = arith.addf %113, %112 : vector<16x64xf32>
    %115 = arith.mulf %78, %114 : vector<16x64xf32>
    %c0_54 = arith.constant 0 : index
    %c0_55 = arith.constant 0 : index
    %116 = vector.load %arg14[%c0_54, %c0_55] : memref<64x32xf32, #tpu.memory_space<vmem>>, vector<64x32xf32>
    %cst_56 = arith.constant dense<0.000000e+00> : vector<16x32xf32>
    %117 = tpu.matmul %115, %116, %cst_56 {dimension_numbers = #tpu.dot_dimension_numbers<[1], [0], [0], [1], [0, 0, 1, 1], [], []>} : vector<16x64xf32>, vector<64x32xf32>, vector<16x32xf32> -> vector<16x32xf32>
    %c0_57 = arith.constant 0 : index
    %c0_58 = arith.constant 0 : index
    %118 = vector.load %arg15[%c0_57, %c0_58] : memref<1x32xf32, #tpu.memory_space<vmem>>, vector<1x32xf32>
    %119 = vector.broadcast %118 : vector<1x32xf32> to vector<16x32xf32>
    %120 = arith.addf %117, %119 : vector<16x32xf32>
    %c0_59 = arith.constant 0 : index
    %c0_60 = arith.constant 0 : index
    %121 = vector.load %arg1[%c0_59, %c0_60] : memref<16x32xf32, #tpu.memory_space<vmem>>, vector<16x32xf32>
    %122 = arith.addf %120, %121 : vector<16x32xf32>
    %123 = arith.addf %122, %71 : vector<16x32xf32>
    %c0_61 = arith.constant 0 : index
    %c0_62 = arith.constant 0 : index
    %124 = vector.load %arg16[%c0_61, %c0_62] : memref<1x32xf32, #tpu.memory_space<vmem>>, vector<1x32xf32>
    %c0_63 = arith.constant 0 : index
    %c0_64 = arith.constant 0 : index
    %125 = vector.load %arg17[%c0_63, %c0_64] : memref<1x32xf32, #tpu.memory_space<vmem>>, vector<1x32xf32>
    %cst_65 = arith.constant dense<0.000000e+00> : vector<16xf32>
    %126 = vector.multi_reduction <add>, %123, %cst_65 [1] : vector<16x32xf32> to vector<16xf32>
    %127 = vector.shape_cast %126 : vector<16xf32> to vector<16x1xf32>
    %cst_66 = arith.constant 3.200000e+01 : f32
    %128 = vector.broadcast %cst_66 : f32 to vector<16x1xf32>
    %129 = arith.divf %127, %128 : vector<16x1xf32>
    %130 = vector.broadcast %129 : vector<16x1xf32> to vector<16x32xf32>
    %131 = arith.subf %123, %130 : vector<16x32xf32>
    %132 = arith.mulf %131, %131 : vector<16x32xf32>
    %cst_67 = arith.constant dense<0.000000e+00> : vector<16xf32>
    %133 = vector.multi_reduction <add>, %132, %cst_67 [1] : vector<16x32xf32> to vector<16xf32>
    %134 = vector.shape_cast %133 : vector<16xf32> to vector<16x1xf32>
    %cst_68 = arith.constant 3.200000e+01 : f32
    %135 = vector.broadcast %cst_68 : f32 to vector<16x1xf32>
    %136 = arith.divf %134, %135 : vector<16x1xf32>
    %137 = vector.broadcast %129 : vector<16x1xf32> to vector<16x32xf32>
    %138 = arith.subf %123, %137 : vector<16x32xf32>
    %cst_69 = arith.constant 9.99999996E-13 : f32
    %139 = vector.broadcast %cst_69 : f32 to vector<16x1xf32>
    %140 = arith.addf %136, %139 : vector<16x1xf32>
    %141 = math.rsqrt %140 : vector<16x1xf32>
    %142 = vector.broadcast %141 : vector<16x1xf32> to vector<16x32xf32>
    %143 = arith.mulf %138, %142 : vector<16x32xf32>
    %144 = vector.broadcast %124 : vector<1x32xf32> to vector<16x32xf32>
    %145 = arith.mulf %143, %144 : vector<16x32xf32>
    %146 = vector.broadcast %125 : vector<1x32xf32> to vector<16x32xf32>
    %147 = arith.addf %145, %146 : vector<16x32xf32>
    %c0_70 = arith.constant 0 : index
    %c0_71 = arith.constant 0 : index
    %148 = vector.load %arg18[%c0_70, %c0_71] : memref<16x32xf32, #tpu.memory_space<vmem>>, vector<16x32xf32>
    tpu.vector_store %arg18[%c0_70, %c0_71], %147 {strides = array<i32>} : memref<16x32xf32, #tpu.memory_space<vmem>>, vector<16x32xf32>,
    return
  }
}

</mosaic_0001>

<llo_original>
// kernel: layoutlmv2_layer.1
$region0: #{layoutlmv2_layer.1}
  #allocation0 [shape = 'u32[]', space=smem, size = 0x4, offset = 0x4, fixed_abs, tag = 'smem constant byte address 0x4 - core index']
  #allocation1 [shape = 'u32[144,128]{1,0:T(1,128)}', space=vmem, size = 0x12000, scoped, tag = 'internal scratch']
  %s0 = inlined_call_operand.vmem [shape: f32[16,32], index: 0, kind: input, shape index: {}]
  %s1 = inlined_call_operand.vmem [shape: f32[16,32], index: 1, kind: input, shape index: {}]
  %s2 = inlined_call_operand.vmem [shape: f32[64,64], index: 2, kind: input, shape index: {}]
  %s3 = inlined_call_operand.vmem [shape: f32[64,32], index: 3, kind: input, shape index: {}]
  %s4 = inlined_call_operand.vmem [shape: f32[64,8], index: 4, kind: input, shape index: {}]
  %s5 = inlined_call_operand.vmem [shape: f32[32,96], index: 5, kind: input, shape index: {}]
  %s6 = inlined_call_operand.vmem [shape: f32[1,32], index: 6, kind: input, shape index: {}]
  %s7 = inlined_call_operand.vmem [shape: f32[1,32], index: 7, kind: input, shape index: {}]
  %s8 = inlined_call_operand.vmem [shape: f32[32,32], index: 8, kind: input, shape index: {}]
  %s9 = inlined_call_operand.vmem [shape: f32[1,32], index: 9, kind: input, shape index: {}]
  %s10 = inlined_call_operand.vmem [shape: f32[1,32], index: 10, kind: input, shape index: {}]
  %s11 = inlined_call_operand.vmem [shape: f32[1,32], index: 11, kind: input, shape index: {}]
  %s12 = inlined_call_operand.vmem [shape: f32[32,64], index: 12, kind: input, shape index: {}]
  %s13 = inlined_call_operand.vmem [shape: f32[1,64], index: 13, kind: input, shape index: {}]
  %s14 = inlined_call_operand.vmem [shape: f32[64,32], index: 14, kind: input, shape index: {}]
  %s15 = inlined_call_operand.vmem [shape: f32[1,32], index: 15, kind: input, shape index: {}]
  %s16 = inlined_call_operand.vmem [shape: f32[1,32], index: 16, kind: input, shape index: {}]
  %s17 = inlined_call_operand.vmem [shape: f32[1,32], index: 17, kind: input, shape index: {}]
  %s18 = inlined_call_operand.hbm [shape: f32[16,32], index: 18, kind: output, shape index: {0}]
  %s19 = inlined_call_operand.vmem [shape: f32[64,8], index: 19, kind: output, shape index: {1}]
  %20 = xla_tuple %s18, %s19
  %s21 = sld [smem:[#allocation0]]
  $region90: #{layoutlmv2_layer.1} parent=0
    _
  %s23 = ssub.s32 1, %s21
  %s24 = scalar_select 0, %s23, %s21
  $region1: #{layoutlmv2_layer.1} parent=0
    #allocation2 [shape = 'u8[8192]{0}', space=vmem, size = 0x2000, scoped, tag = 'output window, operand 0, single buffered']
    #allocation3 [shape = 's32[1]{0}', space=sflag, size = 0x4, scoped, tag = 'scoped memory for layoutlmv2_layer.1']
    %25 = vsyncpa [#allocation3], 0
    // Predicated region
    $region2: #{layoutlmv2_layer.1} parent=1 // pred_check
      _
    $region3: #{layoutlmv2_layer.1} parent=1 // pred_check_branch
      %27 = sbr.rel (0) target = $region5
    $region4: #{layoutlmv2_layer.1} parent=1 // pred_region
      _
    $region5: #{layoutlmv2_layer.1} parent=1 // pred_fallthru
      _
    // Predicated region
    $region6: #{layoutlmv2_layer.1} parent=1 // pred_check
      _
    $region7: #{layoutlmv2_layer.1} parent=1 // pred_check_branch
      %29 = sbr.rel (0) target = $region9
    $region8: #{layoutlmv2_layer.1} parent=1 // pred_region
      _
    $region9: #{layoutlmv2_layer.1} parent=1 // pred_fallthru
      _
    // Predicated region
    $region10: #{layoutlmv2_layer.1} parent=1 // pred_check
      _
    $region11: #{layoutlmv2_layer.1} parent=1 // pred_check_branch
      %31 = sbr.rel (0) target = $region13
    $region12: #{layoutlmv2_layer.1} parent=1 // pred_region
      _
    $region13: #{layoutlmv2_layer.1} parent=1 // pred_fallthru
      _
    // Predicated region
    $region14: #{layoutlmv2_layer.1} parent=1 // pred_check
      _
    $region15: #{layoutlmv2_layer.1} parent=1 // pred_check_branch
      %33 = sbr.rel (0) target = $region17
    $region16: #{layoutlmv2_layer.1} parent=1 // pred_region
      _
    $region17: #{layoutlmv2_layer.1} parent=1 // pred_fallthru
      _
    // Predicated region
    $region18: #{layoutlmv2_layer.1} parent=1 // pred_check
      _
    $region19: #{layoutlmv2_layer.1} parent=1 // pred_check_branch
      %35 = sbr.rel (0) target = $region21
    $region20: #{layoutlmv2_layer.1} parent=1 // pred_region
      _
    $region21: #{layoutlmv2_layer.1} parent=1 // pred_fallthru
      _
    // Predicated region
    $region22: #{layoutlmv2_layer.1} parent=1 // pred_check
      _
    $region23: #{layoutlmv2_layer.1} parent=1 // pred_check_branch
      %37 = sbr.rel (0) target = $region25
    $region24: #{layoutlmv2_layer.1} parent=1 // pred_region
      _
    $region25: #{layoutlmv2_layer.1} parent=1 // pred_fallthru
      _
    // Predicated region
    $region26: #{layoutlmv2_layer.1} parent=1 // pred_check
      _
    $region27: #{layoutlmv2_layer.1} parent=1 // pred_check_branch
      %39 = sbr.rel (0) target = $region29
    $region28: #{layoutlmv2_layer.1} parent=1 // pred_region
      _
    $region29: #{layoutlmv2_layer.1} parent=1 // pred_fallthru
      _
    // Predicated region
    $region30: #{layoutlmv2_layer.1} parent=1 // pred_check
      _
    $region31: #{layoutlmv2_layer.1} parent=1 // pred_check_branch
      %41 = sbr.rel (0) target = $region33
    $region32: #{layoutlmv2_layer.1} parent=1 // pred_region
      _
    $region33: #{layoutlmv2_layer.1} parent=1 // pred_fallthru
      _
    // Predicated region
    $region34: #{layoutlmv2_layer.1} parent=1 // pred_check
      _
    $region35: #{layoutlmv2_layer.1} parent=1 // pred_check_branch
      %43 = sbr.rel (0) target = $region37
    $region36: #{layoutlmv2_layer.1} parent=1 // pred_region
      _
    $region37: #{layoutlmv2_layer.1} parent=1 // pred_fallthru
      _
    // Predicated region
    $region38: #{layoutlmv2_layer.1} parent=1 // pred_check
      _
    $region39: #{layoutlmv2_layer.1} parent=1 // pred_check_branch
      %45 = sbr.rel (0) target = $region41
    $region40: #{layoutlmv2_layer.1} parent=1 // pred_region
      _
    $region41: #{layoutlmv2_layer.1} parent=1 // pred_fallthru
      _
    // Predicated region
    $region42: #{layoutlmv2_layer.1} parent=1 // pred_check
      _
    $region43: #{layoutlmv2_layer.1} parent=1 // pred_check_branch
      %47 = sbr.rel (0) target = $region45
    $region44: #{layoutlmv2_layer.1} parent=1 // pred_region
      _
    $region45: #{layoutlmv2_layer.1} parent=1 // pred_fallthru
      _
    // Predicated region
    $region46: #{layoutlmv2_layer.1} parent=1 // pred_check
      _
    $region47: #{layoutlmv2_layer.1} parent=1 // pred_check_branch
      %49 = sbr.rel (0) target = $region49
    $region48: #{layoutlmv2_layer.1} parent=1 // pred_region
      _
    $region49: #{layoutlmv2_layer.1} parent=1 // pred_fallthru
      _
    // Predicated region
    $region50: #{layoutlmv2_layer.1} parent=1 // pred_check
      _
    $region51: #{layoutlmv2_layer.1} parent=1 // pred_check_branch
      %51 = sbr.rel (0) target = $region53
    $region52: #{layoutlmv2_layer.1} parent=1 // pred_region
      _
    $region53: #{layoutlmv2_layer.1} parent=1 // pred_fallthru
      _
    // Predicated region
    $region54: #{layoutlmv2_layer.1} parent=1 // pred_check
      _
    $region55: #{layoutlmv2_layer.1} parent=1 // pred_check_branch
      %53 = sbr.rel (0) target = $region57
    $region56: #{layoutlmv2_layer.1} parent=1 // pred_region
      _
    $region57: #{layoutlmv2_layer.1} parent=1 // pred_fallthru
      _
    // Predicated region
    $region58: #{layoutlmv2_layer.1} parent=1 // pred_check
      _
    $region59: #{layoutlmv2_layer.1} parent=1 // pred_check_branch
      %55 = sbr.rel (0) target = $region61
    $region60: #{layoutlmv2_layer.1} parent=1 // pred_region
      _
    $region61: #{layoutlmv2_layer.1} parent=1 // pred_fallthru
      _
    // Predicated region
    $region62: #{layoutlmv2_layer.1} parent=1 // pred_check
      _
    $region63: #{layoutlmv2_layer.1} parent=1 // pred_check_branch
      %57 = sbr.rel (0) target = $region65
    $region64: #{layoutlmv2_layer.1} parent=1 // pred_region
      _
    $region65: #{layoutlmv2_layer.1} parent=1 // pred_fallthru
      _
    // Predicated region
    $region66: #{layoutlmv2_layer.1} parent=1 // pred_check
      _
    $region67: #{layoutlmv2_layer.1} parent=1 // pred_check_branch
      %59 = sbr.rel (0) target = $region69
    $region68: #{layoutlmv2_layer.1} parent=1 // pred_region
      _
    $region69: #{layoutlmv2_layer.1} parent=1 // pred_fallthru
      _
    // Predicated region
    $region70: #{layoutlmv2_layer.1} parent=1 // pred_check
      _
    $region71: #{layoutlmv2_layer.1} parent=1 // pred_check_branch
      %61 = sbr.rel (0) target = $region73
    $region72: #{layoutlmv2_layer.1} parent=1 // pred_region
      _
    $region73: #{layoutlmv2_layer.1} parent=1 // pred_fallthru
      _
    %v62 = vld [vmem:[%s0] sm:$0xff]
    %v63 = vld [vmem:[%s0 + $0x8] sm:$0xff]
    %v64 = vld [vmem:[%s5] sm:$0xff]
    %v65 = vld [vmem:[%s5 + $0x8] sm:$0xff]
    %v66 = vld [vmem:[%s5 + $0x10] sm:$0xff]
    %v67 = vld [vmem:[%s5 + $0x18] sm:$0xff]
    %vm68 = vcmask 261120
    %v70 = vsel %vm68, %v62, 0
    %v73 = vsel %vm68, %v63, 0
    %75 = vmatprep.subr.mxu0 0.0
    %76 = vmatpush1.msra.mxu0 %v64
    %77 = vmatprep.subr.mxu0 0.0
    %78 = vmatpush1.msra.mxu0 %v65
    %79 = vmatprep.subr.mxu0 0.0
    %80 = vmatpush1.msra.mxu0 %v66
    %81 = vmatprep.subr.mxu0 0.0
    %82 = vmatpush1.msra.mxu0 %v67
    %83 = vmatprep.subr.mxu0 0.0
    %84 = vmatpush1.msra.mxu0 0.0
    %85 = vmatprep.subr.mxu0 0.0
    %86 = vmatpush1.msra.mxu0 0.0
    %87 = vmatprep.subr.mxu0 0.0
    %88 = vmatpush1.msra.mxu0 0.0
    %89 = vmatprep.subr.mxu0 0.0
    %90 = vmatpush1.msra.mxu0 0.0
    %91 = vmatprep.subr.mxu0 0.0
    %92 = vmatpush1.msra.mxu0 0.0
    %93 = vmatprep.subr.mxu0 0.0
    %94 = vmatpush1.msra.mxu0 0.0
    %95 = vmatprep.subr.mxu0 0.0
    %96 = vmatpush1.msra.mxu0 0.0
    %97 = vmatprep.subr.mxu0 0.0
    %98 = vmatpush1.msra.mxu0 0.0
    %99 = vmatprep.subr.mxu0 0.0
    %100 = vmatpush1.msra.mxu0 0.0
    %101 = vmatprep.subr.mxu0 0.0
    %102 = vmatpush1.msra.mxu0 0.0
    %103 = vmatprep.subr.mxu0 0.0
    %104 = vmatpush1.msra.mxu0 0.0
    %105 = vmatprep.subr.mxu0 0.0
    %106 = vmatpush1.msra.mxu0 0.0
    %107 = vmatprep.subr.mxu0 0.0
    %108 = vmatpush1.msra.mxu0 0.0
    %109 = vmatprep.subr.mxu0 0.0
    %110 = vmatpush1.msra.mxu0 0.0
    %111 = vmatprep.subr.mxu0 0.0
    %112 = vmatpush1.msra.mxu0 0.0
    %113 = vmatprep.subr.mxu0 0.0
    %114 = vmatpush1.msra.mxu0 0.0
    %115 = vmatprep.subr.mxu0 0.0
    %116 = vmatpush1.msra.mxu0 0.0
    %117 = vmatprep.subr.mxu0 0.0
    %118 = vmatpush1.msra.mxu0 0.0
    %119 = vmatprep.subr.mxu0 0.0
    %120 = vmatpush1.msra.mxu0 0.0
    %121 = vmatprep.subr.mxu0 0.0
    %122 = vmatpush1.msra.mxu0 0.0
    %123 = vmatprep.subr.mxu0 0.0
    %124 = vmatpush1.msra.mxu0 0.0
    %125 = vmatprep.subr.mxu0 0.0
    %126 = vmatpush1.msra.mxu0 0.0
    %127 = vmatprep.subr.mxu0 0.0
    %128 = vmatpush1.msra.mxu0 0.0
    %129 = vmatprep.subr.mxu0 0.0
    %130 = vmatpush1.msra.mxu0 0.0
    %131 = vmatprep.subr.mxu0 0.0
    %132 = vmatpush1.msra.mxu0 0.0
    %133 = vmatprep.subr.mxu0 0.0
    %134 = vmatpush1.msra.mxu0 0.0
    %135 = vmatprep.subr.mxu0 0.0
    %136 = vmatpush1.msra.mxu0 0.0
    %137 = vmatprep.subr.mxu0 0.0
    %138 = vmatpush1.msra.mxu0 0.0
    %139 = vmatprep.mubr.f32.mxu0 0.0
    %140 = vmatmul.mubr.f32.gmra.mrb[0].mxu0 %v70
    %v141 = vpop.f32.mrb[0].mxu0
    %v142 = vadd.f32 0.0, %v141
    %v143 = vpop.f32.mrb[0].mxu0
    %144 = vmatprep.mubr.f32.mxu0 0.0
    %145 = vmatmul.mubr.f32.gmra.mrb[0].mxu0 %v73
    %v146 = vpop.f32.mrb[0].mxu0
    %v147 = vadd.f32 0.0, %v146
    %v148 = vpop.f32.mrb[0].mxu0
    %149 = vmatprep.mubr.f32.mxu0 0.0
    %150 = vmatmul.mubr.f32.gmra.mrb[0].mxu0 %v70
    %v151 = vpop.f32.mrb[0].mxu0
    %v152 = vadd.f32 0.0, %v151
    %v153 = vpop.f32.mrb[0].mxu0
    %154 = vmatprep.mubr.f32.mxu0 0.0
    %155 = vmatmul.mubr.f32.gmra.mrb[0].mxu0 %v73
    %v156 = vpop.f32.mrb[0].mxu0
    %v157 = vadd.f32 0.0, %v156
    %v158 = vpop.f32.mrb[0].mxu0
    %159 = vmatprep.mubr.f32.mxu0 0.0
    %160 = vmatmul.mubr.f32.gmra.mrb[0].mxu0 %v70
    %v161 = vpop.f32.mrb[0].mxu0
    %v162 = vadd.f32 0.0, %v161
    %v163 = vpop.f32.mrb[0].mxu0
    %164 = vmatprep.mubr.f32.mxu0 0.0
    %165 = vmatmul.mubr.f32.gmra.mrb[0].mxu0 %v73
    %v166 = vpop.f32.mrb[0].mxu0
    %v167 = vadd.f32 0.0, %v166
    %v168 = vpop.f32.mrb[0].mxu0
    %169 = vmatprep.mubr.f32.mxu0 0.0
    %170 = vmatmul.mubr.f32.gmra.mrb[0].mxu0 %v70
    %v171 = vpop.f32.mrb[0].mxu0
    %v172 = vadd.f32 0.0, %v171
    %v173 = vpop.f32.mrb[0].mxu0
    %174 = vmatprep.mubr.f32.mxu0 0.0
    %175 = vmatmul.mubr.f32.gmra.mrb[0].mxu0 %v73
    %v176 = vpop.f32.mrb[0].mxu0
    %v177 = vadd.f32 0.0, %v176
    %v178 = vpop.f32.mrb[0].mxu0
    %179 = vdwg.mxu0
    %v180 = vld [vmem:[%s3] sm:$0xff]
    %v181 = vld [vmem:[%s3 + $0x8] sm:$0xff]
    %v182 = vld [vmem:[%s3 + $0x10] sm:$0xff]
    %v183 = vld [vmem:[%s3 + $0x18] sm:$0xff]
    %v184 = vld [vmem:[%s3 + $0x20] sm:$0xff]
    %v185 = vld [vmem:[%s3 + $0x28] sm:$0xff]
    %v186 = vld [vmem:[%s3 + $0x30] sm:$0xff]
    %v187 = vld [vmem:[%s3 + $0x38] sm:$0xff]
    %v188 = vld [vmem:[%s6] sm:$0x1]
    %v190 = vlaneseq
    %v191 = vshrl.u32 %v190, 7
    %v192 = vsub.s32 0, %v191
    %v193 = vrot.slane %v188, %v192
    %v195 = vadd.f32 %v142, %v193
    %v196 = vadd.f32 %v147, %v193
    %v197 = vadd.f32 %v152, %v193
    %v198 = vadd.f32 %v157, %v193
    %v199 = vadd.f32 %v162, %v193
    %v200 = vadd.f32 %v167, %v193
    %v201 = vadd.f32 %v172, %v193
    %v202 = vadd.f32 %v177, %v193
    %v203 = vmul.f32 %v195, 0.35355338
    %v204 = vmul.f32 %v196, 0.35355338
    %v205 = vmul.f32 %v197, 0.35355338
    %v206 = vmul.f32 %v198, 0.35355338
    %v207 = vmul.f32 %v199, 0.35355338
    %v208 = vmul.f32 %v200, 0.35355338
    %v209 = vmul.f32 %v201, 0.35355338
    %v210 = vmul.f32 %v202, 0.35355338
    %219 = vrot.lane.b32.xlu0 %v180, 32
    %v220 = vpop.permute.xlu0 %219
    %221 = vrot.lane.b32.xlu0 %v181, 32
    %v222 = vpop.permute.xlu0 %221
    %223 = vrot.lane.b32.xlu0 %v182, 32
    %v224 = vpop.permute.xlu0 %223
    %225 = vrot.lane.b32.xlu0 %v183, 32
    %v226 = vpop.permute.xlu0 %225
    %227 = vrot.lane.b32.xlu0 %v184, 32
    %v228 = vpop.permute.xlu0 %227
    %229 = vrot.lane.b32.xlu0 %v185, 32
    %v230 = vpop.permute.xlu0 %229
    %231 = vrot.lane.b32.xlu0 %v186, 32
    %v232 = vpop.permute.xlu0 %231
    %233 = vrot.lane.b32.xlu0 %v187, 32
    %v234 = vpop.permute.xlu0 %233
    %v243 = vmul.f32 %v142, %v220
    %v244 = vmul.f32 %v147, %v222
    %v245 = vmul.f32 %v152, %v224
    %v246 = vmul.f32 %v157, %v226
    %v247 = vmul.f32 %v162, %v228
    %v248 = vmul.f32 %v167, %v230
    %v249 = vmul.f32 %v172, %v232
    %v250 = vmul.f32 %v177, %v234
    %v251 = vld [vmem:[%s7] sm:$0x1]
    %v253 = vlaneseq
    %v254 = vshrl.u32 %v253, 7
    %v255 = vsub.s32 0, %v254
    %v256 = vrot.slane %v251, %v255
    %257 = vrot.lane.b32.xlu0 %v256, 64
    %v258 = vpop.permute.xlu0 %257
    %v260 = vadd.f32 %v142, %v258
    %v261 = vadd.f32 %v147, %v258
    %v262 = vadd.f32 %v152, %v258
    %v263 = vadd.f32 %v157, %v258
    %v264 = vadd.f32 %v162, %v258
    %v265 = vadd.f32 %v167, %v258
    %v266 = vadd.f32 %v172, %v258
    %v267 = vadd.f32 %v177, %v258
    %268 = vrot.lane.b32.xlu0 %v180, 64
    %v269 = vpop.permute.xlu0 %268
    %270 = vrot.lane.b32.xlu0 %v181, 64
    %v271 = vpop.permute.xlu0 %270
    %272 = vrot.lane.b32.xlu0 %v182, 64
    %v273 = vpop.permute.xlu0 %272
    %274 = vrot.lane.b32.xlu0 %v183, 64
    %v275 = vpop.permute.xlu0 %274
    %276 = vrot.lane.b32.xlu0 %v184, 64
    %v277 = vpop.permute.xlu0 %276
    %278 = vrot.lane.b32.xlu0 %v185, 64
    %v279 = vpop.permute.xlu0 %278
    %280 = vrot.lane.b32.xlu0 %v186, 64
    %v281 = vpop.permute.xlu0 %280
    %282 = vrot.lane.b32.xlu0 %v187, 64
    %v283 = vpop.permute.xlu0 %282
    %v292 = vmul.f32 %v260, %v269
    %v293 = vmul.f32 %v261, %v271
    %v294 = vmul.f32 %v262, %v273
    %v295 = vmul.f32 %v263, %v275
    %v296 = vmul.f32 %v264, %v277
    %v297 = vmul.f32 %v265, %v279
    %v298 = vmul.f32 %v266, %v281
    %v299 = vmul.f32 %v267, %v283
    %v300 = vld [vmem:[%s2] sm:$0xff]
    %v301 = vld [vmem:[%s2 + $0x8] sm:$0xff]
    %v302 = vld [vmem:[%s2 + $0x10] sm:$0xff]
    %v303 = vld [vmem:[%s2 + $0x18] sm:$0xff]
    %v304 = vld [vmem:[%s2 + $0x20] sm:$0xff]
    %v305 = vld [vmem:[%s2 + $0x28] sm:$0xff]
    %v306 = vld [vmem:[%s2 + $0x30] sm:$0xff]
    %v307 = vld [vmem:[%s2 + $0x38] sm:$0xff]
    %316 = vrot.lane.b32.xlu0 %v243, 96
    %v317 = vpop.permute.xlu0 %316
    %318 = vrot.lane.b32.xlu0 %v244, 96
    %v319 = vpop.permute.xlu0 %318
    %320 = vrot.lane.b32.xlu0 %v245, 96
    %v321 = vpop.permute.xlu0 %320
    %322 = vrot.lane.b32.xlu0 %v246, 96
    %v323 = vpop.permute.xlu0 %322
    %324 = vrot.lane.b32.xlu0 %v247, 96
    %v325 = vpop.permute.xlu0 %324
    %326 = vrot.lane.b32.xlu0 %v248, 96
    %v327 = vpop.permute.xlu0 %326
    %328 = vrot.lane.b32.xlu0 %v249, 96
    %v329 = vpop.permute.xlu0 %328
    %330 = vrot.lane.b32.xlu0 %v250, 96
    %v331 = vpop.permute.xlu0 %330
    %v333 = vsel %vm68, %v203, 0
    %v336 = vsel %vm68, %v204, 0
    %v339 = vsel %vm68, %v205, 0
    %v342 = vsel %vm68, %v206, 0
    %v345 = vsel %vm68, %v207, 0
    %v348 = vsel %vm68, %v208, 0
    %v351 = vsel %vm68, %v209, 0
    %v354 = vsel %vm68, %v210, 0
    %v356 = vsel %vm68, %v317, 0
    %v358 = vsel %vm68, %v319, 0
    %v360 = vsel %vm68, %v321, 0
    %v362 = vsel %vm68, %v323, 0
    %v364 = vsel %vm68, %v325, 0
    %v366 = vsel %vm68, %v327, 0
    %v368 = vsel %vm68, %v329, 0
    %v370 = vsel %vm68, %v331, 0
    %372 = vmatprep.subr.mxu0 0.0
    %373 = vmatpush1.xpose.msra.mxu0 %v356
    %374 = vmatprep.subr.mxu0 0.0
    %375 = vmatpush1.xpose.msra.mxu0 %v358
    %376 = vmatprep.subr.mxu0 0.0
    %377 = vmatpush1.xpose.msra.mxu0 %v360
    %378 = vmatprep.subr.mxu0 0.0
    %379 = vmatpush1.xpose.msra.mxu0 %v362
    %380 = vmatprep.subr.mxu0 0.0
    %381 = vmatpush1.xpose.msra.mxu0 %v364
    %382 = vmatprep.subr.mxu0 0.0
    %383 = vmatpush1.xpose.msra.mxu0 %v366
    %384 = vmatprep.subr.mxu0 0.0
    %385 = vmatpush1.xpose.msra.mxu0 %v368
    %386 = vmatprep.subr.mxu0 0.0
    %387 = vmatpush1.xpose.msra.mxu0 %v370
    %388 = vmatprep.subr.mxu0 0.0
    %389 = vmatpush1.xpose.msra.mxu0 0.0
    %390 = vmatprep.subr.mxu0 0.0
    %391 = vmatpush1.xpose.msra.mxu0 0.0
    %392 = vmatprep.subr.mxu0 0.0
    %393 = vmatpush1.xpose.msra.mxu0 0.0
    %394 = vmatprep.subr.mxu0 0.0
    %395 = vmatpush1.xpose.msra.mxu0 0.0
    %396 = vmatprep.subr.mxu0 0.0
    %397 = vmatpush1.xpose.msra.mxu0 0.0
    %398 = vmatprep.subr.mxu0 0.0
    %399 = vmatpush1.xpose.msra.mxu0 0.0
    %400 = vmatprep.subr.mxu0 0.0
    %401 = vmatpush1.xpose.msra.mxu0 0.0
    %402 = vmatprep.subr.mxu0 0.0
    %403 = vmatpush1.xpose.msra.mxu0 0.0
    %404 = vmatprep.subr.mxu0 0.0
    %405 = vmatpush1.xpose.msra.mxu0 0.0
    %406 = vmatprep.subr.mxu0 0.0
    %407 = vmatpush1.xpose.msra.mxu0 0.0
    %408 = vmatprep.subr.mxu0 0.0
    %409 = vmatpush1.xpose.msra.mxu0 0.0
    %410 = vmatprep.subr.mxu0 0.0
    %411 = vmatpush1.xpose.msra.mxu0 0.0
    %412 = vmatprep.subr.mxu0 0.0
    %413 = vmatpush1.xpose.msra.mxu0 0.0
    %414 = vmatprep.subr.mxu0 0.0
    %415 = vmatpush1.xpose.msra.mxu0 0.0
    %416 = vmatprep.subr.mxu0 0.0
    %417 = vmatpush1.xpose.msra.mxu0 0.0
    %418 = vmatprep.subr.mxu0 0.0
    %419 = vmatpush1.xpose.msra.mxu0 0.0
    %420 = vmatprep.subr.mxu0 0.0
    %421 = vmatpush1.xpose.msra.mxu0 0.0
    %422 = vmatprep.subr.mxu0 0.0
    %423 = vmatpush1.xpose.msra.mxu0 0.0
    %424 = vmatprep.subr.mxu0 0.0
    %425 = vmatpush1.xpose.msra.mxu0 0.0
    %426 = vmatprep.subr.mxu0 0.0
    %427 = vmatpush1.xpose.msra.mxu0 0.0
    %428 = vmatprep.subr.mxu0 0.0
    %429 = vmatpush1.xpose.msra.mxu0 0.0
    %430 = vmatprep.subr.mxu0 0.0
    %431 = vmatpush1.xpose.msra.mxu0 0.0
    %432 = vmatprep.subr.mxu0 0.0
    %433 = vmatpush1.xpose.msra.mxu0 0.0
    %434 = vmatprep.subr.mxu0 0.0
    %435 = vmatpush1.xpose.msra.mxu0 0.0
    %436 = vmatprep.mubr.f32.mxu0 0.0
    %437 = vmatmul.mubr.f32.gmra.mrb[0].mxu0 %v333
    %v438 = vpop.f32.mrb[0].mxu0
    %v439 = vadd.f32 %v300, %v438
    %v440 = vpop.f32.mrb[0].mxu0
    %441 = vmatprep.mubr.f32.mxu0 0.0
    %442 = vmatmul.mubr.f32.gmra.mrb[0].mxu0 %v336
    %v443 = vpop.f32.mrb[0].mxu0
    %v444 = vadd.f32 %v301, %v443
    %v445 = vpop.f32.mrb[0].mxu0
    %446 = vmatprep.mubr.f32.mxu0 0.0
    %447 = vmatmul.mubr.f32.gmra.mrb[0].mxu0 %v339
    %v448 = vpop.f32.mrb[0].mxu0
    %v449 = vadd.f32 %v302, %v448
    %v450 = vpop.f32.mrb[0].mxu0
    %451 = vmatprep.mubr.f32.mxu0 0.0
    %452 = vmatmul.mubr.f32.gmra.mrb[0].mxu0 %v342
    %v453 = vpop.f32.mrb[0].mxu0
    %v454 = vadd.f32 %v303, %v453
    %v455 = vpop.f32.mrb[0].mxu0
    %456 = vmatprep.mubr.f32.mxu0 0.0
    %457 = vmatmul.mubr.f32.gmra.mrb[0].mxu0 %v345
    %v458 = vpop.f32.mrb[0].mxu0
    %v459 = vadd.f32 %v304, %v458
    %v460 = vpop.f32.mrb[0].mxu0
    %461 = vmatprep.mubr.f32.mxu0 0.0
    %462 = vmatmul.mubr.f32.gmra.mrb[0].mxu0 %v348
    %v463 = vpop.f32.mrb[0].mxu0
    %v464 = vadd.f32 %v305, %v463
    %v465 = vpop.f32.mrb[0].mxu0
    %466 = vmatprep.mubr.f32.mxu0 0.0
    %467 = vmatmul.mubr.f32.gmra.mrb[0].mxu0 %v351
    %v468 = vpop.f32.mrb[0].mxu0
    %v469 = vadd.f32 %v306, %v468
    %v470 = vpop.f32.mrb[0].mxu0
    %471 = vmatprep.mubr.f32.mxu0 0.0
    %472 = vmatmul.mubr.f32.gmra.mrb[0].mxu0 %v354
    %v473 = vpop.f32.mrb[0].mxu0
    %v474 = vadd.f32 %v307, %v473
    %v475 = vpop.f32.mrb[0].mxu0
    %476 = vdwg.mxu0
    %vm477 = vcmask 523264
    %v478 = vsel %vm477, %v439, -inf
    %479 = vmax.xlane.f32.xlu0 %v478
    %v480 = vpop.xlane.xlu0 %479
    %v481 = vsel %vm477, %v444, -inf
    %482 = vmax.xlane.f32.xlu0 %v481
    %v483 = vpop.xlane.xlu0 %482
    %v484 = vsel %vm477, %v449, -inf
    %485 = vmax.xlane.f32.xlu0 %v484
    %v486 = vpop.xlane.xlu0 %485
    %v487 = vsel %vm477, %v454, -inf
    %488 = vmax.xlane.f32.xlu0 %v487
    %v489 = vpop.xlane.xlu0 %488
    %v490 = vsel %vm477, %v459, -inf
    %491 = vmax.xlane.f32.xlu0 %v490
    %v492 = vpop.xlane.xlu0 %491
    %v493 = vsel %vm477, %v464, -inf
    %494 = vmax.xlane.f32.xlu0 %v493
    %v495 = vpop.xlane.xlu0 %494
    %v496 = vsel %vm477, %v469, -inf
    %497 = vmax.xlane.f32.xlu0 %v496
    %v498 = vpop.xlane.xlu0 %497
    %v499 = vsel %vm477, %v474, -inf
    %500 = vmax.xlane.f32.xlu0 %v499
    %v501 = vpop.xlane.xlu0 %500
    %v502 = vsub.f32 %v439, %v480
    %v503 = vsub.f32 %v444, %v483
    %v504 = vsub.f32 %v449, %v486
    %v505 = vsub.f32 %v454, %v489
    %v506 = vsub.f32 %v459, %v492
    %v507 = vsub.f32 %v464, %v495
    %v508 = vsub.f32 %v469, %v498
    %v509 = vsub.f32 %v474, %v501
    %v510 = vmul.f32 %v502, 1.442695
    %v511 = vpow.pop %v510
    %v512 = vmul.f32 %v503, 1.442695
    %v513 = vpow.pop %v512
    %v514 = vmul.f32 %v504, 1.442695
    %v515 = vpow.pop %v514
    %v516 = vmul.f32 %v505, 1.442695
    %v517 = vpow.pop %v516
    %v518 = vmul.f32 %v506, 1.442695
    %v519 = vpow.pop %v518
    %v520 = vmul.f32 %v507, 1.442695
    %v521 = vpow.pop %v520
    %v522 = vmul.f32 %v508, 1.442695
    %v523 = vpow.pop %v522
    %v524 = vmul.f32 %v509, 1.442695
    %v525 = vpow.pop %v524
    %v526 = vsel %vm477, %v511, 0.0
    %527 = vadd.xlane.f32.xlu0 %v526
    %v528 = vpop.xlane.xlu0 %527
    %v529 = vsel %vm477, %v513, 0.0
    %530 = vadd.xlane.f32.xlu0 %v529
    %v531 = vpop.xlane.xlu0 %530
    %v532 = vsel %vm477, %v515, 0.0
    %533 = vadd.xlane.f32.xlu0 %v532
    %v534 = vpop.xlane.xlu0 %533
    %v535 = vsel %vm477, %v517, 0.0
    %536 = vadd.xlane.f32.xlu0 %v535
    %v537 = vpop.xlane.xlu0 %536
    %v538 = vsel %vm477, %v519, 0.0
    %539 = vadd.xlane.f32.xlu0 %v538
    %v540 = vpop.xlane.xlu0 %539
    %v541 = vsel %vm477, %v521, 0.0
    %542 = vadd.xlane.f32.xlu0 %v541
    %v543 = vpop.xlane.xlu0 %542
    %v544 = vsel %vm477, %v523, 0.0
    %545 = vadd.xlane.f32.xlu0 %v544
    %v546 = vpop.xlane.xlu0 %545
    %v547 = vsel %vm477, %v525, 0.0
    %548 = vadd.xlane.f32.xlu0 %v547
    %v549 = vpop.xlane.xlu0 %548
    %v550 = vrcp.pop %v528
    %v551 = vrcp.pop %v531
    %v552 = vrcp.pop %v534
    %v553 = vrcp.pop %v537
    %v554 = vrcp.pop %v540
    %v555 = vrcp.pop %v543
    %v556 = vrcp.pop %v546
    %v557 = vrcp.pop %v549
    %v558 = vmul.f32 %v511, %v550
    %v559 = vmul.f32 %v513, %v551
    %v560 = vmul.f32 %v515, %v552
    %v561 = vmul.f32 %v517, %v553
    %v562 = vmul.f32 %v519, %v554
    %v563 = vmul.f32 %v521, %v555
    %v564 = vmul.f32 %v523, %v556
    %v565 = vmul.f32 %v525, %v557
    %v566 = vld [vmem:[%s4] sm:$0xff]
    %v567 = vld [vmem:[%s4 + $0x8] sm:$0xff]
    %v568 = vld [vmem:[%s4 + $0x10] sm:$0xff]
    %v569 = vld [vmem:[%s4 + $0x18] sm:$0xff]
    %v570 = vld [vmem:[%s4 + $0x20] sm:$0xff]
    %v571 = vld [vmem:[%s4 + $0x28] sm:$0xff]
    %v572 = vld [vmem:[%s4 + $0x30] sm:$0xff]
    %v573 = vld [vmem:[%s4 + $0x38] sm:$0xff]
    %v575 = vsel %vm477, %v558, 0
    %v578 = vsel %vm477, %v559, 0
    %v581 = vsel %vm477, %v560, 0
    %v584 = vsel %vm477, %v561, 0
    %v587 = vsel %vm477, %v562, 0
    %v590 = vsel %vm477, %v563, 0
    %v593 = vsel %vm477, %v564, 0
    %v596 = vsel %vm477, %v565, 0
    %598 = vmatprep.subr.mxu0 0.0
    %599 = vmatpush1.msra.mxu0 %v566
    %600 = vmatprep.subr.mxu0 0.0
    %601 = vmatpush1.msra.mxu0 %v567
    %602 = vmatprep.subr.mxu0 0.0
    %603 = vmatpush1.msra.mxu0 %v568
    %604 = vmatprep.subr.mxu0 0.0
    %605 = vmatpush1.msra.mxu0 %v569
    %606 = vmatprep.subr.mxu0 0.0
    %607 = vmatpush1.msra.mxu0 %v570
    %608 = vmatprep.subr.mxu0 0.0
    %609 = vmatpush1.msra.mxu0 %v571
    %610 = vmatprep.subr.mxu0 0.0
    %611 = vmatpush1.msra.mxu0 %v572
    %612 = vmatprep.subr.mxu0 0.0
    %613 = vmatpush1.msra.mxu0 %v573
    %614 = vmatprep.subr.mxu0 0.0
    %615 = vmatpush1.msra.mxu0 0.0
    %616 = vmatprep.subr.mxu0 0.0
    %617 = vmatpush1.msra.mxu0 0.0
    %618 = vmatprep.subr.mxu0 0.0
    %619 = vmatpush1.msra.mxu0 0.0
    %620 = vmatprep.subr.mxu0 0.0
    %621 = vmatpush1.msra.mxu0 0.0
    %622 = vmatprep.subr.mxu0 0.0
    %623 = vmatpush1.msra.mxu0 0.0
    %624 = vmatprep.subr.mxu0 0.0
    %625 = vmatpush1.msra.mxu0 0.0
    %626 = vmatprep.subr.mxu0 0.0
    %627 = vmatpush1.msra.mxu0 0.0
    %628 = vmatprep.subr.mxu0 0.0
    %629 = vmatpush1.msra.mxu0 0.0
    %630 = vmatprep.subr.mxu0 0.0
    %631 = vmatpush1.msra.mxu0 0.0
    %632 = vmatprep.subr.mxu0 0.0
    %633 = vmatpush1.msra.mxu0 0.0
    %634 = vmatprep.subr.mxu0 0.0
    %635 = vmatpush1.msra.mxu0 0.0
    %636 = vmatprep.subr.mxu0 0.0
    %637 = vmatpush1.msra.mxu0 0.0
    %638 = vmatprep.subr.mxu0 0.0
    %639 = vmatpush1.msra.mxu0 0.0
    %640 = vmatprep.subr.mxu0 0.0
    %641 = vmatpush1.msra.mxu0 0.0
    %642 = vmatprep.subr.mxu0 0.0
    %643 = vmatpush1.msra.mxu0 0.0
    %644 = vmatprep.subr.mxu0 0.0
    %645 = vmatpush1.msra.mxu0 0.0
    %646 = vmatprep.subr.mxu0 0.0
    %647 = vmatpush1.msra.mxu0 0.0
    %648 = vmatprep.subr.mxu0 0.0
    %649 = vmatpush1.msra.mxu0 0.0
    %650 = vmatprep.subr.mxu0 0.0
    %651 = vmatpush1.msra.mxu0 0.0
    %652 = vmatprep.subr.mxu0 0.0
    %653 = vmatpush1.msra.mxu0 0.0
    %654 = vmatprep.subr.mxu0 0.0
    %655 = vmatpush1.msra.mxu0 0.0
    %656 = vmatprep.subr.mxu0 0.0
    %657 = vmatpush1.msra.mxu0 0.0
    %658 = vmatprep.subr.mxu0 0.0
    %659 = vmatpush1.msra.mxu0 0.0
    %660 = vmatprep.subr.mxu0 0.0
    %661 = vmatpush1.msra.mxu0 0.0
    %662 = vmatprep.mubr.f32.mxu0 0.0
    %663 = vmatmul.mubr.f32.gmra.mrb[0].mxu0 %v575
    %v664 = vpop.f32.mrb[0].mxu0
    %v665 = vadd.f32 0.0, %v664
    %v666 = vpop.f32.mrb[0].mxu0
    %667 = vmatprep.mubr.f32.mxu0 0.0
    %668 = vmatmul.mubr.f32.gmra.mrb[0].mxu0 %v578
    %v669 = vpop.f32.mrb[0].mxu0
    %v670 = vadd.f32 0.0, %v669
    %v671 = vpop.f32.mrb[0].mxu0
    %672 = vmatprep.mubr.f32.mxu0 0.0
    %673 = vmatmul.mubr.f32.gmra.mrb[0].mxu0 %v581
    %v674 = vpop.f32.mrb[0].mxu0
    %v675 = vadd.f32 0.0, %v674
    %v676 = vpop.f32.mrb[0].mxu0
    %677 = vmatprep.mubr.f32.mxu0 0.0
    %678 = vmatmul.mubr.f32.gmra.mrb[0].mxu0 %v584
    %v679 = vpop.f32.mrb[0].mxu0
    %v680 = vadd.f32 0.0, %v679
    %v681 = vpop.f32.mrb[0].mxu0
    %682 = vmatprep.mubr.f32.mxu0 0.0
    %683 = vmatmul.mubr.f32.gmra.mrb[0].mxu0 %v587
    %v684 = vpop.f32.mrb[0].mxu0
    %v685 = vadd.f32 0.0, %v684
    %v686 = vpop.f32.mrb[0].mxu0
    %687 = vmatprep.mubr.f32.mxu0 0.0
    %688 = vmatmul.mubr.f32.gmra.mrb[0].mxu0 %v590
    %v689 = vpop.f32.mrb[0].mxu0
    %v690 = vadd.f32 0.0, %v689
    %v691 = vpop.f32.mrb[0].mxu0
    %692 = vmatprep.mubr.f32.mxu0 0.0
    %693 = vmatmul.mubr.f32.gmra.mrb[0].mxu0 %v593
    %v694 = vpop.f32.mrb[0].mxu0
    %v695 = vadd.f32 0.0, %v694
    %v696 = vpop.f32.mrb[0].mxu0
    %697 = vmatprep.mubr.f32.mxu0 0.0
    %698 = vmatmul.mubr.f32.gmra.mrb[0].mxu0 %v596
    %v699 = vpop.f32.mrb[0].mxu0
    %v700 = vadd.f32 0.0, %v699
    %v701 = vpop.f32.mrb[0].mxu0
    %702 = vdwg.mxu0
    %vm703 = vcmask 64512
    %704 = vst.msk [vmem:[%s19] sm:$0xff] %vm703, %v665
    %705 = vst.msk [vmem:[%s19 + $0x8] sm:$0xff] %vm703, %v670
    %706 = vst.msk [vmem:[%s19 + $0x10] sm:$0xff] %vm703, %v675
    %707 = vst.msk [vmem:[%s19 + $0x18] sm:$0xff] %vm703, %v680
    %708 = vst.msk [vmem:[%s19 + $0x20] sm:$0xff] %vm703, %v685
    %709 = vst.msk [vmem:[%s19 + $0x28] sm:$0xff] %vm703, %v690
    %710 = vst.msk [vmem:[%s19 + $0x30] sm:$0xff] %vm703, %v695
    %711 = vst.msk [vmem:[%s19 + $0x38] sm:$0xff] %vm703, %v700
    %720 = vrot.lane.b32.xlu0 %v292, 64
    %v721 = vpop.permute.xlu0 %720
    %722 = vrot.lane.b32.xlu0 %v293, 64
    %v723 = vpop.permute.xlu0 %722
    %724 = vrot.lane.b32.xlu0 %v294, 64
    %v725 = vpop.permute.xlu0 %724
    %726 = vrot.lane.b32.xlu0 %v295, 64
    %v727 = vpop.permute.xlu0 %726
    %728 = vrot.lane.b32.xlu0 %v296, 64
    %v729 = vpop.permute.xlu0 %728
    %730 = vrot.lane.b32.xlu0 %v297, 64
    %v731 = vpop.permute.xlu0 %730
    %732 = vrot.lane.b32.xlu0 %v298, 64
    %v733 = vpop.permute.xlu0 %732
    %734 = vrot.lane.b32.xlu0 %v299, 64
    %v735 = vpop.permute.xlu0 %734
    %744 = vmatprep.subr.mxu0 0.0
    %745 = vmatpush1.msra.mxu0 %v721
    %746 = vmatprep.subr.mxu0 0.0
    %747 = vmatpush1.msra.mxu0 %v723
    %748 = vmatprep.subr.mxu0 0.0
    %749 = vmatpush1.msra.mxu0 %v725
    %750 = vmatprep.subr.mxu0 0.0
    %751 = vmatpush1.msra.mxu0 %v727
    %752 = vmatprep.subr.mxu0 0.0
    %753 = vmatpush1.msra.mxu0 %v729
    %754 = vmatprep.subr.mxu0 0.0
    %755 = vmatpush1.msra.mxu0 %v731
    %756 = vmatprep.subr.mxu0 0.0
    %757 = vmatpush1.msra.mxu0 %v733
    %758 = vmatprep.subr.mxu0 0.0
    %759 = vmatpush1.msra.mxu0 %v735
    %760 = vmatprep.subr.mxu0 0.0
    %761 = vmatpush1.msra.mxu0 0.0
    %762 = vmatprep.subr.mxu0 0.0
    %763 = vmatpush1.msra.mxu0 0.0
    %764 = vmatprep.subr.mxu0 0.0
    %765 = vmatpush1.msra.mxu0 0.0
    %766 = vmatprep.subr.mxu0 0.0
    %767 = vmatpush1.msra.mxu0 0.0
    %768 = vmatprep.subr.mxu0 0.0
    %769 = vmatpush1.msra.mxu0 0.0
    %770 = vmatprep.subr.mxu0 0.0
    %771 = vmatpush1.msra.mxu0 0.0
    %772 = vmatprep.subr.mxu0 0.0
    %773 = vmatpush1.msra.mxu0 0.0
    %774 = vmatprep.subr.mxu0 0.0
    %775 = vmatpush1.msra.mxu0 0.0
    %776 = vmatprep.subr.mxu0 0.0
    %777 = vmatpush1.msra.mxu0 0.0
    %778 = vmatprep.subr.mxu0 0.0
    %779 = vmatpush1.msra.mxu0 0.0
    %780 = vmatprep.subr.mxu0 0.0
    %781 = vmatpush1.msra.mxu0 0.0
    %782 = vmatprep.subr.mxu0 0.0
    %783 = vmatpush1.msra.mxu0 0.0
    %784 = vmatprep.subr.mxu0 0.0
    %785 = vmatpush1.msra.mxu0 0.0
    %786 = vmatprep.subr.mxu0 0.0
    %787 = vmatpush1.msra.mxu0 0.0
    %788 = vmatprep.subr.mxu0 0.0
    %789 = vmatpush1.msra.mxu0 0.0
    %790 = vmatprep.subr.mxu0 0.0
    %791 = vmatpush1.msra.mxu0 0.0
    %792 = vmatprep.subr.mxu0 0.0
    %793 = vmatpush1.msra.mxu0 0.0
    %794 = vmatprep.subr.mxu0 0.0
    %795 = vmatpush1.msra.mxu0 0.0
    %796 = vmatprep.subr.mxu0 0.0
    %797 = vmatpush1.msra.mxu0 0.0
    %798 = vmatprep.subr.mxu0 0.0
    %799 = vmatpush1.msra.mxu0 0.0
    %800 = vmatprep.subr.mxu0 0.0
    %801 = vmatpush1.msra.mxu0 0.0
    %802 = vmatprep.subr.mxu0 0.0
    %803 = vmatpush1.msra.mxu0 0.0
    %804 = vmatprep.subr.mxu0 0.0
    %805 = vmatpush1.msra.mxu0 0.0
    %806 = vmatprep.subr.mxu0 0.0
    %807 = vmatpush1.msra.mxu0 0.0
    %808 = vmatprep.mubr.f32.mxu0 0.0
    %809 = vmatmul.mubr.f32.gmra.mrb[0].mxu0 %v575
    %v810 = vpop.f32.mrb[0].mxu0
    %v811 = vadd.f32 0.0, %v810
    %v812 = vpop.f32.mrb[0].mxu0
    %813 = vmatprep.mubr.f32.mxu0 0.0
    %814 = vmatmul.mubr.f32.gmra.mrb[0].mxu0 %v578
    %v815 = vpop.f32.mrb[0].mxu0
    %v816 = vadd.f32 0.0, %v815
    %v817 = vpop.f32.mrb[0].mxu0
    %818 = vmatprep.mubr.f32.mxu0 0.0
    %819 = vmatmul.mubr.f32.gmra.mrb[0].mxu0 %v581
    %v820 = vpop.f32.mrb[0].mxu0
    %v821 = vadd.f32 0.0, %v820
    %v822 = vpop.f32.mrb[0].mxu0
    %823 = vmatprep.mubr.f32.mxu0 0.0
    %824 = vmatmul.mubr.f32.gmra.mrb[0].mxu0 %v584
    %v825 = vpop.f32.mrb[0].mxu0
    %v826 = vadd.f32 0.0, %v825
    %v827 = vpop.f32.mrb[0].mxu0
    %828 = vmatprep.mubr.f32.mxu0 0.0
    %829 = vmatmul.mubr.f32.gmra.mrb[0].mxu0 %v587
    %v830 = vpop.f32.mrb[0].mxu0
    %v831 = vadd.f32 0.0, %v830
    %v832 = vpop.f32.mrb[0].mxu0
    %833 = vmatprep.mubr.f32.mxu0 0.0
    %834 = vmatmul.mubr.f32.gmra.mrb[0].mxu0 %v590
    %v835 = vpop.f32.mrb[0].mxu0
    %v836 = vadd.f32 0.0, %v835
    %v837 = vpop.f32.mrb[0].mxu0
    %838 = vmatprep.mubr.f32.mxu0 0.0
    %839 = vmatmul.mubr.f32.gmra.mrb[0].mxu0 %v593
    %v840 = vpop.f32.mrb[0].mxu0
    %v841 = vadd.f32 0.0, %v840
    %v842 = vpop.f32.mrb[0].mxu0
    %843 = vmatprep.mubr.f32.mxu0 0.0
    %844 = vmatmul.mubr.f32.gmra.mrb[0].mxu0 %v596
    %v845 = vpop.f32.mrb[0].mxu0
    %v846 = vadd.f32 0.0, %v845
    %v847 = vpop.f32.mrb[0].mxu0
    %848 = vdwg.mxu0
    %v849 = vadd.f32 %v811, %v821
    %v850 = vadd.f32 %v816, %v826
    %v851 = vadd.f32 %v849, %v831
    %v852 = vadd.f32 %v850, %v836
    %v853 = vadd.f32 %v851, %v841
    %v854 = vadd.f32 %v852, %v846
    %v855 = vld [vmem:[%s8] sm:$0xff]
    %v856 = vld [vmem:[%s8 + $0x8] sm:$0xff]
    %v857 = vld [vmem:[%s8 + $0x10] sm:$0xff]
    %v858 = vld [vmem:[%s8 + $0x18] sm:$0xff]
    %v859 = vld [vmem:[%s9] sm:$0x1]
    %v861 = vlaneseq
    %v862 = vshrl.u32 %v861, 7
    %v863 = vsub.s32 0, %v862
    %v864 = vrot.slane %v859, %v863
    %v867 = vsel %vm68, %v853, 0
    %v870 = vsel %vm68, %v854, 0
    %872 = vmatprep.subr.mxu0 0.0
    %873 = vmatpush1.msra.mxu0 %v855
    %874 = vmatprep.subr.mxu0 0.0
    %875 = vmatpush1.msra.mxu0 %v856
    %876 = vmatprep.subr.mxu0 0.0
    %877 = vmatpush1.msra.mxu0 %v857
    %878 = vmatprep.subr.mxu0 0.0
    %879 = vmatpush1.msra.mxu0 %v858
    %880 = vmatprep.subr.mxu0 0.0
    %881 = vmatpush1.msra.mxu0 0.0
    %882 = vmatprep.subr.mxu0 0.0
    %883 = vmatpush1.msra.mxu0 0.0
    %884 = vmatprep.subr.mxu0 0.0
    %885 = vmatpush1.msra.mxu0 0.0
    %886 = vmatprep.subr.mxu0 0.0
    %887 = vmatpush1.msra.mxu0 0.0
    %888 = vmatprep.subr.mxu0 0.0
    %889 = vmatpush1.msra.mxu0 0.0
    %890 = vmatprep.subr.mxu0 0.0
    %891 = vmatpush1.msra.mxu0 0.0
    %892 = vmatprep.subr.mxu0 0.0
    %893 = vmatpush1.msra.mxu0 0.0
    %894 = vmatprep.subr.mxu0 0.0
    %895 = vmatpush1.msra.mxu0 0.0
    %896 = vmatprep.subr.mxu0 0.0
    %897 = vmatpush1.msra.mxu0 0.0
    %898 = vmatprep.subr.mxu0 0.0
    %899 = vmatpush1.msra.mxu0 0.0
    %900 = vmatprep.subr.mxu0 0.0
    %901 = vmatpush1.msra.mxu0 0.0
    %902 = vmatprep.subr.mxu0 0.0
    %903 = vmatpush1.msra.mxu0 0.0
    %904 = vmatprep.subr.mxu0 0.0
    %905 = vmatpush1.msra.mxu0 0.0
    %906 = vmatprep.subr.mxu0 0.0
    %907 = vmatpush1.msra.mxu0 0.0
    %908 = vmatprep.subr.mxu0 0.0
    %909 = vmatpush1.msra.mxu0 0.0
    %910 = vmatprep.subr.mxu0 0.0
    %911 = vmatpush1.msra.mxu0 0.0
    %912 = vmatprep.subr.mxu0 0.0
    %913 = vmatpush1.msra.mxu0 0.0
    %914 = vmatprep.subr.mxu0 0.0
    %915 = vmatpush1.msra.mxu0 0.0
    %916 = vmatprep.subr.mxu0 0.0
    %917 = vmatpush1.msra.mxu0 0.0
    %918 = vmatprep.subr.mxu0 0.0
    %919 = vmatpush1.msra.mxu0 0.0
    %920 = vmatprep.subr.mxu0 0.0
    %921 = vmatpush1.msra.mxu0 0.0
    %922 = vmatprep.subr.mxu0 0.0
    %923 = vmatpush1.msra.mxu0 0.0
    %924 = vmatprep.subr.mxu0 0.0
    %925 = vmatpush1.msra.mxu0 0.0
    %926 = vmatprep.subr.mxu0 0.0
    %927 = vmatpush1.msra.mxu0 0.0
    %928 = vmatprep.subr.mxu0 0.0
    %929 = vmatpush1.msra.mxu0 0.0
    %930 = vmatprep.subr.mxu0 0.0
    %931 = vmatpush1.msra.mxu0 0.0
    %932 = vmatprep.subr.mxu0 0.0
    %933 = vmatpush1.msra.mxu0 0.0
    %934 = vmatprep.subr.mxu0 0.0
    %935 = vmatpush1.msra.mxu0 0.0
    %936 = vmatprep.mubr.f32.mxu0 0.0
    %937 = vmatmul.mubr.f32.gmra.mrb[0].mxu0 %v867
    %v938 = vpop.f32.mrb[0].mxu0
    %v939 = vadd.f32 %v864, %v938
    %v940 = vpop.f32.mrb[0].mxu0
    %941 = vmatprep.mubr.f32.mxu0 0.0
    %942 = vmatmul.mubr.f32.gmra.mrb[0].mxu0 %v870
    %v943 = vpop.f32.mrb[0].mxu0
    %v944 = vadd.f32 %v864, %v943
    %v945 = vpop.f32.mrb[0].mxu0
    %946 = vdwg.mxu0
    %v947 = vadd.f32 %v939, %v62
    %v948 = vadd.f32 %v944, %v63
    %v949 = vld [vmem:[%s10] sm:$0x1]
    %v950 = vld [vmem:[%s11] sm:$0x1]
    %v951 = vsel %vm68, %v947, 0.0
    %952 = vadd.xlane.f32.xlu0 %v951
    %v953 = vpop.xlane.xlu0 %952
    %v954 = vsel %vm68, %v948, 0.0
    %955 = vadd.xlane.f32.xlu0 %v954
    %v956 = vpop.xlane.xlu0 %955
    %v957 = vrcp.pop 32.0
    %v958 = vmul.f32 %v953, %v957
    %v959 = vmul.f32 %v956, %v957
    %v960 = vsub.f32 %v947, %v958
    %v961 = vsub.f32 %v948, %v959
    %v962 = vmul.f32 %v960, %v960
    %v963 = vmul.f32 %v961, %v961
    %v964 = vsel %vm68, %v962, 0.0
    %965 = vadd.xlane.f32.xlu0 %v964
    %v966 = vpop.xlane.xlu0 %965
    %v967 = vsel %vm68, %v963, 0.0
    %968 = vadd.xlane.f32.xlu0 %v967
    %v969 = vpop.xlane.xlu0 %968
    %v970 = vmul.f32 %v966, %v957
    %v971 = vmul.f32 %v969, %v957
    %v972 = vadd.f32 %v970, 1e-12
    %v973 = vadd.f32 %v971, 1e-12
    %v974 = vrsqrt.pop %v972
    %v975 = vrsqrt.pop %v973
    %v976 = vmul.f32 %v960, %v974
    %v977 = vmul.f32 %v961, %v975
    %v979 = vlaneseq
    %v980 = vshrl.u32 %v979, 7
    %v981 = vsub.s32 0, %v980
    %v982 = vrot.slane %v949, %v981
    %v984 = vmul.f32 %v976, %v982
    %v985 = vmul.f32 %v977, %v982
    %v987 = vlaneseq
    %v988 = vshrl.u32 %v987, 7
    %v989 = vsub.s32 0, %v988
    %v990 = vrot.slane %v950, %v989
    %v992 = vadd.f32 %v984, %v990
    %v993 = vadd.f32 %v985, %v990
    %v994 = vld [vmem:[%s12] sm:$0xff]
    %v995 = vld [vmem:[%s12 + $0x8] sm:$0xff]
    %v996 = vld [vmem:[%s12 + $0x10] sm:$0xff]
    %v997 = vld [vmem:[%s12 + $0x18] sm:$0xff]
    %v998 = vld [vmem:[%s13] sm:$0x1]
    %v1000 = vlaneseq
    %v1001 = vshrl.u32 %v1000, 7
    %v1002 = vsub.s32 0, %v1001
    %v1003 = vrot.slane %v998, %v1002
    %v1006 = vsel %vm68, %v992, 0
    %v1009 = vsel %vm68, %v993, 0
    %1011 = vmatprep.subr.mxu0 0.0
    %1012 = vmatpush1.msra.mxu0 %v994
    %1013 = vmatprep.subr.mxu0 0.0
    %1014 = vmatpush1.msra.mxu0 %v995
    %1015 = vmatprep.subr.mxu0 0.0
    %1016 = vmatpush1.msra.mxu0 %v996
    %1017 = vmatprep.subr.mxu0 0.0
    %1018 = vmatpush1.msra.mxu0 %v997
    %1019 = vmatprep.subr.mxu0 0.0
    %1020 = vmatpush1.msra.mxu0 0.0
    %1021 = vmatprep.subr.mxu0 0.0
    %1022 = vmatpush1.msra.mxu0 0.0
    %1023 = vmatprep.subr.mxu0 0.0
    %1024 = vmatpush1.msra.mxu0 0.0
    %1025 = vmatprep.subr.mxu0 0.0
    %1026 = vmatpush1.msra.mxu0 0.0
    %1027 = vmatprep.subr.mxu0 0.0
    %1028 = vmatpush1.msra.mxu0 0.0
    %1029 = vmatprep.subr.mxu0 0.0
    %1030 = vmatpush1.msra.mxu0 0.0
    %1031 = vmatprep.subr.mxu0 0.0
    %1032 = vmatpush1.msra.mxu0 0.0
    %1033 = vmatprep.subr.mxu0 0.0
    %1034 = vmatpush1.msra.mxu0 0.0
    %1035 = vmatprep.subr.mxu0 0.0
    %1036 = vmatpush1.msra.mxu0 0.0
    %1037 = vmatprep.subr.mxu0 0.0
    %1038 = vmatpush1.msra.mxu0 0.0
    %1039 = vmatprep.subr.mxu0 0.0
    %1040 = vmatpush1.msra.mxu0 0.0
    %1041 = vmatprep.subr.mxu0 0.0
    %1042 = vmatpush1.msra.mxu0 0.0
    %1043 = vmatprep.subr.mxu0 0.0
    %1044 = vmatpush1.msra.mxu0 0.0
    %1045 = vmatprep.subr.mxu0 0.0
    %1046 = vmatpush1.msra.mxu0 0.0
    %1047 = vmatprep.subr.mxu0 0.0
    %1048 = vmatpush1.msra.mxu0 0.0
    %1049 = vmatprep.subr.mxu0 0.0
    %1050 = vmatpush1.msra.mxu0 0.0
    %1051 = vmatprep.subr.mxu0 0.0
    %1052 = vmatpush1.msra.mxu0 0.0
    %1053 = vmatprep.subr.mxu0 0.0
    %1054 = vmatpush1.msra.mxu0 0.0
    %1055 = vmatprep.subr.mxu0 0.0
    %1056 = vmatpush1.msra.mxu0 0.0
    %1057 = vmatprep.subr.mxu0 0.0
    %1058 = vmatpush1.msra.mxu0 0.0
    %1059 = vmatprep.subr.mxu0 0.0
    %1060 = vmatpush1.msra.mxu0 0.0
    %1061 = vmatprep.subr.mxu0 0.0
    %1062 = vmatpush1.msra.mxu0 0.0
    %1063 = vmatprep.subr.mxu0 0.0
    %1064 = vmatpush1.msra.mxu0 0.0
    %1065 = vmatprep.subr.mxu0 0.0
    %1066 = vmatpush1.msra.mxu0 0.0
    %1067 = vmatprep.subr.mxu0 0.0
    %1068 = vmatpush1.msra.mxu0 0.0
    %1069 = vmatprep.subr.mxu0 0.0
    %1070 = vmatpush1.msra.mxu0 0.0
    %1071 = vmatprep.subr.mxu0 0.0
    %1072 = vmatpush1.msra.mxu0 0.0
    %1073 = vmatprep.subr.mxu0 0.0
    %1074 = vmatpush1.msra.mxu0 0.0
    %1075 = vmatprep.mubr.f32.mxu0 0.0
    %1076 = vmatmul.mubr.f32.gmra.mrb[0].mxu0 %v1006
    %v1077 = vpop.f32.mrb[0].mxu0
    %v1078 = vadd.f32 %v1003, %v1077
    %v1079 = vpop.f32.mrb[0].mxu0
    %1080 = vmatprep.mubr.f32.mxu0 0.0
    %1081 = vmatmul.mubr.f32.gmra.mrb[0].mxu0 %v1009
    %v1082 = vpop.f32.mrb[0].mxu0
    %v1083 = vadd.f32 %v1003, %v1082
    %v1084 = vpop.f32.mrb[0].mxu0
    %1085 = vdwg.mxu0
    %v1086 = vmul.f32 %v1078, 0.5
    %v1087 = vmul.f32 %v1083, 0.5
    %v1088 = vmul.f32 %v1078, 0.70710677
    %v1089 = vmul.f32 %v1083, 0.70710677
    %v1090 = vand.u32 2147483647, %v1088
    %v1091 = vand.u32 2147483647, %v1089
    %v1092 = vmul.f32 %v1090, 0.3275911
    %v1093 = vmul.f32 %v1091, 0.3275911
    %v1094 = vadd.f32 %v1092, 1.0
    %v1095 = vadd.f32 %v1093, 1.0
    %v1096 = vrcp.pop %v1094
    %v1097 = vrcp.pop %v1095
    %v1098 = vmul.f32 %v1096, 1.0614054
    %v1099 = vmul.f32 %v1097, 1.0614054
    %v1100 = vadd.f32 %v1098, -1.4531521
    %v1101 = vadd.f32 %v1099, -1.4531521
    %v1102 = vmul.f32 %v1096, %v1100
    %v1103 = vmul.f32 %v1097, %v1101
    %v1104 = vadd.f32 %v1102, 1.4214138
    %v1105 = vadd.f32 %v1103, 1.4214138
    %v1106 = vmul.f32 %v1096, %v1104
    %v1107 = vmul.f32 %v1097, %v1105
    %v1108 = vadd.f32 %v1106, -0.28449672
    %v1109 = vadd.f32 %v1107, -0.28449672
    %v1110 = vmul.f32 %v1096, %v1108
    %v1111 = vmul.f32 %v1097, %v1109
    %v1112 = vadd.f32 %v1110, 0.2548296
    %v1113 = vadd.f32 %v1111, 0.2548296
    %v1114 = vmul.f32 %v1096, %v1112
    %v1115 = vmul.f32 %v1097, %v1113
    %v1116 = vsub.f32 0.0, %v1090
    %v1117 = vsub.f32 0.0, %v1091
    %v1118 = vmul.f32 %v1116, %v1090
    %v1119 = vmul.f32 %v1117, %v1091
    %v1120 = vmul.f32 %v1118, 1.442695
    %v1121 = vpow.pop %v1120
    %v1122 = vmul.f32 %v1119, 1.442695
    %v1123 = vpow.pop %v1122
    %v1124 = vmul.f32 %v1114, %v1121
    %v1125 = vmul.f32 %v1115, %v1123
    %v1126 = vsub.f32 1.0, %v1124
    %v1127 = vsub.f32 1.0, %v1125
    %vm1128 = vcmp.ge.f32.partialorder %v1088, 0.0
    %vm1129 = vcmp.ge.f32.partialorder %v1089, 0.0
    %v1130 = vsub.f32 0.0, %v1126
    %v1131 = vsub.f32 0.0, %v1127
    %v1132 = vsel %vm1128, %v1126, %v1130
    %v1133 = vsel %vm1129, %v1127, %v1131
    %v1134 = vadd.f32 %v1132, 1.0
    %v1135 = vadd.f32 %v1133, 1.0
    %v1136 = vmul.f32 %v1086, %v1134
    %v1137 = vmul.f32 %v1087, %v1135
    %v1138 = vld [vmem:[%s14] sm:$0xff]
    %v1139 = vld [vmem:[%s14 + $0x8] sm:$0xff]
    %v1140 = vld [vmem:[%s14 + $0x10] sm:$0xff]
    %v1141 = vld [vmem:[%s14 + $0x18] sm:$0xff]
    %v1142 = vld [vmem:[%s14 + $0x20] sm:$0xff]
    %v1143 = vld [vmem:[%s14 + $0x28] sm:$0xff]
    %v1144 = vld [vmem:[%s14 + $0x30] sm:$0xff]
    %v1145 = vld [vmem:[%s14 + $0x38] sm:$0xff]
    %v1146 = vld [vmem:[%s15] sm:$0x1]
    %v1148 = vlaneseq
    %v1149 = vshrl.u32 %v1148, 7
    %v1150 = vsub.s32 0, %v1149
    %v1151 = vrot.slane %v1146, %v1150
    %v1154 = vsel %vm477, %v1136, 0
    %v1157 = vsel %vm477, %v1137, 0
    %1159 = vmatprep.subr.mxu0 0.0
    %1160 = vmatpush1.msra.mxu0 %v1138
    %1161 = vmatprep.subr.mxu0 0.0
    %1162 = vmatpush1.msra.mxu0 %v1139
    %1163 = vmatprep.subr.mxu0 0.0
    %1164 = vmatpush1.msra.mxu0 %v1140
    %1165 = vmatprep.subr.mxu0 0.0
    %1166 = vmatpush1.msra.mxu0 %v1141
    %1167 = vmatprep.subr.mxu0 0.0
    %1168 = vmatpush1.msra.mxu0 %v1142
    %1169 = vmatprep.subr.mxu0 0.0
    %1170 = vmatpush1.msra.mxu0 %v1143
    %1171 = vmatprep.subr.mxu0 0.0
    %1172 = vmatpush1.msra.mxu0 %v1144
    %1173 = vmatprep.subr.mxu0 0.0
    %1174 = vmatpush1.msra.mxu0 %v1145
    %1175 = vmatprep.subr.mxu0 0.0
    %1176 = vmatpush1.msra.mxu0 0.0
    %1177 = vmatprep.subr.mxu0 0.0
    %1178 = vmatpush1.msra.mxu0 0.0
    %1179 = vmatprep.subr.mxu0 0.0
    %1180 = vmatpush1.msra.mxu0 0.0
    %1181 = vmatprep.subr.mxu0 0.0
    %1182 = vmatpush1.msra.mxu0 0.0
    %1183 = vmatprep.subr.mxu0 0.0
    %1184 = vmatpush1.msra.mxu0 0.0
    %1185 = vmatprep.subr.mxu0 0.0
    %1186 = vmatpush1.msra.mxu0 0.0
    %1187 = vmatprep.subr.mxu0 0.0
    %1188 = vmatpush1.msra.mxu0 0.0
    %1189 = vmatprep.subr.mxu0 0.0
    %1190 = vmatpush1.msra.mxu0 0.0
    %1191 = vmatprep.subr.mxu0 0.0
    %1192 = vmatpush1.msra.mxu0 0.0
    %1193 = vmatprep.subr.mxu0 0.0
    %1194 = vmatpush1.msra.mxu0 0.0
    %1195 = vmatprep.subr.mxu0 0.0
    %1196 = vmatpush1.msra.mxu0 0.0
    %1197 = vmatprep.subr.mxu0 0.0
    %1198 = vmatpush1.msra.mxu0 0.0
    %1199 = vmatprep.subr.mxu0 0.0
    %1200 = vmatpush1.msra.mxu0 0.0
    %1201 = vmatprep.subr.mxu0 0.0
    %1202 = vmatpush1.msra.mxu0 0.0
    %1203 = vmatprep.subr.mxu0 0.0
    %1204 = vmatpush1.msra.mxu0 0.0
    %1205 = vmatprep.subr.mxu0 0.0
    %1206 = vmatpush1.msra.mxu0 0.0
    %1207 = vmatprep.subr.mxu0 0.0
    %1208 = vmatpush1.msra.mxu0 0.0
    %1209 = vmatprep.subr.mxu0 0.0
    %1210 = vmatpush1.msra.mxu0 0.0
    %1211 = vmatprep.subr.mxu0 0.0
    %1212 = vmatpush1.msra.mxu0 0.0
    %1213 = vmatprep.subr.mxu0 0.0
    %1214 = vmatpush1.msra.mxu0 0.0
    %1215 = vmatprep.subr.mxu0 0.0
    %1216 = vmatpush1.msra.mxu0 0.0
    %1217 = vmatprep.subr.mxu0 0.0
    %1218 = vmatpush1.msra.mxu0 0.0
    %1219 = vmatprep.subr.mxu0 0.0
    %1220 = vmatpush1.msra.mxu0 0.0
    %1221 = vmatprep.subr.mxu0 0.0
    %1222 = vmatpush1.msra.mxu0 0.0
    %1223 = vmatprep.mubr.f32.mxu0 0.0
    %1224 = vmatmul.mubr.f32.gmra.mrb[0].mxu0 %v1154
    %v1225 = vpop.f32.mrb[0].mxu0
    %v1226 = vadd.f32 %v1151, %v1225
    %v1227 = vpop.f32.mrb[0].mxu0
    %1228 = vmatprep.mubr.f32.mxu0 0.0
    %1229 = vmatmul.mubr.f32.gmra.mrb[0].mxu0 %v1157
    %v1230 = vpop.f32.mrb[0].mxu0
    %v1231 = vadd.f32 %v1151, %v1230
    %v1232 = vpop.f32.mrb[0].mxu0
    %1233 = vdwg.mxu0
    %v1234 = vld [vmem:[%s1] sm:$0xff]
    %v1235 = vld [vmem:[%s1 + $0x8] sm:$0xff]
    %v1236 = vadd.f32 %v1226, %v1234
    %v1237 = vadd.f32 %v1231, %v1235
    %v1238 = vadd.f32 %v1236, %v992
    %v1239 = vadd.f32 %v1237, %v993
    %v1240 = vld [vmem:[%s16] sm:$0x1]
    %v1241 = vld [vmem:[%s17] sm:$0x1]
    %v1242 = vsel %vm68, %v1238, 0.0
    %1243 = vadd.xlane.f32.xlu0 %v1242
    %v1244 = vpop.xlane.xlu0 %1243
    %v1245 = vsel %vm68, %v1239, 0.0
    %1246 = vadd.xlane.f32.xlu0 %v1245
    %v1247 = vpop.xlane.xlu0 %1246
    %v1248 = vmul.f32 %v1244, %v957
    %v1249 = vmul.f32 %v1247, %v957
    %v1250 = vsub.f32 %v1238, %v1248
    %v1251 = vsub.f32 %v1239, %v1249
    %v1252 = vmul.f32 %v1250, %v1250
    %v1253 = vmul.f32 %v1251, %v1251
    %v1254 = vsel %vm68, %v1252, 0.0
    %1255 = vadd.xlane.f32.xlu0 %v1254
    %v1256 = vpop.xlane.xlu0 %1255
    %v1257 = vsel %vm68, %v1253, 0.0
    %1258 = vadd.xlane.f32.xlu0 %v1257
    %v1259 = vpop.xlane.xlu0 %1258
    %v1260 = vmul.f32 %v1256, %v957
    %v1261 = vmul.f32 %v1259, %v957
    %v1262 = vadd.f32 %v1260, 1e-12
    %v1263 = vadd.f32 %v1261, 1e-12
    %v1264 = vrsqrt.pop %v1262
    %v1265 = vrsqrt.pop %v1263
    %v1266 = vmul.f32 %v1250, %v1264
    %v1267 = vmul.f32 %v1251, %v1265
    %v1269 = vlaneseq
    %v1270 = vshrl.u32 %v1269, 7
    %v1271 = vsub.s32 0, %v1270
    %v1272 = vrot.slane %v1240, %v1271
    %v1274 = vmul.f32 %v1266, %v1272
    %v1275 = vmul.f32 %v1267, %v1272
    %v1277 = vlaneseq
    %v1278 = vshrl.u32 %v1277, 7
    %v1279 = vsub.s32 0, %v1278
    %v1280 = vrot.slane %v1241, %v1279
    %v1282 = vadd.f32 %v1274, %v1280
    %v1283 = vadd.f32 %v1275, %v1280
    %1284 = vst.msk [vmem:[#allocation2] sm:$0xff] %vm68, %v1282
    %1285 = vst.msk [vmem:[#allocation2 + $0x8] sm:$0xff] %vm68, %v1283
    // Predicated region
    $region74: #{layoutlmv2_layer.1} parent=1 // pred_check
      _
    $region75: #{layoutlmv2_layer.1} parent=1 // pred_check_branch
      %1287 = sbr.rel (0) target = $region77
    $region76: #{layoutlmv2_layer.1} parent=1 // pred_region
      %s1289 = ssub.s32 256, 256
      %1290 = vsyncadd [#allocation3], %s1289
      %s1291 = sshll.u32 [#allocation2], 4
      %s1292 = int_to_ptr.vmem [resolvable:$true] %s1291
      %1297 = dma.vmem_to_hbm [thread:$0]  %s1292, 256, %s18, [#allocation3], 128, 128, 8
    $region77: #{layoutlmv2_layer.1} parent=1 // pred_fallthru
      _
    // Predicated region
    $region78: #{layoutlmv2_layer.1} parent=1 // pred_check
      _
    $region79: #{layoutlmv2_layer.1} parent=1 // pred_check_branch
      %1299 = sbr.rel (0) target = $region81
    $region80: #{layoutlmv2_layer.1} parent=1 // pred_region
      _
    $region81: #{layoutlmv2_layer.1} parent=1 // pred_fallthru
      _
    // Predicated region
    $region82: #{layoutlmv2_layer.1} parent=1 // pred_check
      _
    $region83: #{layoutlmv2_layer.1} parent=1 // pred_check_branch
      %1301 = sbr.rel (0) target = $region85
    $region84: #{layoutlmv2_layer.1} parent=1 // pred_region
      %1302 = dma.done [#allocation3], 256
    $region85: #{layoutlmv2_layer.1} parent=1 // pred_fallthru
      _
    // Predicated region
    $region86: #{layoutlmv2_layer.1} parent=1 // pred_check
      _
    $region87: #{layoutlmv2_layer.1} parent=1 // pred_check_branch
      %1304 = sbr.rel (0) target = $region89
    $region88: #{layoutlmv2_layer.1} parent=1 // pred_region
      _
    $region89: #{layoutlmv2_layer.1} parent=1 // pred_fallthru
      _
    %1305 = vsyncpa [#allocation3], 1

</llo_original>
